<compile_context>
chip_gen: v6e
topology: v6e:2x2x1
jax: 0.10.0
libtpu: 0.0.40
codegen_flags: <defaults>
</compile_context>

<pallas_src>
import jax
import jax.numpy as jnp
import numpy as np
from jax.experimental import pallas as pl
from jax.experimental.pallas import tpu as pltpu

IMG_LEN = 1024
TXT_LEN = 300
N_CLASSES = 50
CLS_PAD = 128          # 50 zero-padded up to a full lane width
D = 32                 # model width d
H = D // 2             # per-modality projection width (16)
INV_SQRT_D = 1.0 / float(np.sqrt(D))

# ----------------------------- slab row layouts -------------------------------
# GSA slab: (131, 128) f32
GSA_WVKQ = 0           # rows   0: 32  -> [Wv | Wk | Wq | 0]
GSA_WH = D             # rows  32: 96  -> block-diag [[Whk,0],[0,Whq]] in cols 0:64
GSA_WHKQ = 3 * D       # rows  96:128  -> Whkq in cols 0:32
GSA_BVKQ = 4 * D       # row  128      -> [bv | bk | bq | 0]
GSA_BH = 4 * D + 1     # row  129      -> [bhk | bhq | 0]
GSA_BHKQ = 4 * D + 2   # row  130      -> [bhkq | 0]
GSA_ROWS = 4 * D + 3   # 131

# FFN slab: (194, 128) f32; FFN2 slab additionally carries the output head.
FFN_W1A = 0            # rows   0: 32  -> fc_1 weight rows for x1
FFN_W1B = D            # rows  32: 64  -> fc_1 weight rows for x2 (the GSA branch)
FFN_W2 = 2 * D         # rows  64:192  -> fc_2 weight, cols 0:32 real
FFN_B1 = 6 * D         # row  192
FFN_B2 = 6 * D + 1     # row  193      (cols 0:32 real)
FFN_ROWS = 6 * D + 2   # 194
HEAD_W = 200           # rows 200:232  -> fc_out weight, cols 0:50 real (8-aligned start)
HEAD_B = 232           # row  232      -> cols 0:50 bias, cols 50:128 = -1e30
FFN2_ROWS = 233


# ------------------------------ kernel helpers --------------------------------

def _gsa(x, w):
    """Global self-attention over the batch; `w` is a packed (131,128) slab."""
    # Fused V/K/Q projection: one (B,32) @ (32,128) matmul -> [v | k | q | 0].
    vkq = (jnp.dot(x, w[GSA_WVKQ:GSA_WVKQ + D, :],
                   preferred_element_type=jnp.float32)
           + w[GSA_BVKQ:GSA_BVKQ + 1, :])                       # (B, 128)
    v = vkq[:, 0:D]
    k = vkq[:, D:2 * D]
    q = vkq[:, 2 * D:3 * D]

    # Helper fc_k / fc_q as one block-diagonal matmul on the contiguous [k|q]
    # lane slice -> [k1 | q1 | 0].
    kq1 = (jnp.dot(vkq[:, D:3 * D], w[GSA_WH:GSA_WH + 2 * D, :],
                   preferred_element_type=jnp.float32)
           + w[GSA_BH:GSA_BH + 1, :])                           # (B, 128)
    pre = (jnp.dot(kq1[:, 0:D] * kq1[:, D:2 * D],
                   w[GSA_WHKQ:GSA_WHKQ + D, :],
                   preferred_element_type=jnp.float32)
           + w[GSA_BHKQ:GSA_BHKQ + 1, :])[:, 0:D]               # (B, 32)

    # sigmoid via EUP reciprocal (divide-free on the VALU).
    kq = pl.reciprocal(1.0 + jnp.exp(-pre), approx=True)
    k2 = k * kq
    q2 = q * kq

    # (B, B) scores; explicit transpose instead of a transposed-RHS dot_general.
    scores = jnp.dot(k2, q2.T, preferred_element_type=jnp.float32) * INV_SQRT_D

    # nn.Softmax() is applied to the *flattened* (B*B) score matrix: global max
    # and global sum (NOT per-row).
    g_max = jnp.max(jnp.max(scores, axis=1, keepdims=True), axis=0, keepdims=True)
    e = jnp.exp(scores - g_max)
    g_sum = jnp.sum(jnp.sum(e, axis=1, keepdims=True), axis=0, keepdims=True)

    # Deferred normalisation: (e @ v) * (1/sum) instead of (e/sum) @ v.
    return (jnp.dot(e, v, preferred_element_type=jnp.float32)
            * pl.reciprocal(g_sum, approx=True))                # (B, 32)


def _ffn(x1, x2, w):
    """fc_2(relu(fc_1(cat(x1, x2)))), with the cat folded into a row-split slab."""
    h = (jnp.dot(x1, w[FFN_W1A:FFN_W1A + D, :], preferred_element_type=jnp.float32)
         + jnp.dot(x2, w[FFN_W1B:FFN_W1B + D, :], preferred_element_type=jnp.float32)
         + w[FFN_B1:FFN_B1 + 1, :])
    h = jnp.maximum(h, 0.0)
    # TODO(synk): nn.Dropout(0.25) is the identity in eval mode; train-mode
    # dropout (RNG masking) is intentionally not implemented.
    return (jnp.dot(h, w[FFN_W2:FFN_W2 + 4 * D, :], preferred_element_type=jnp.float32)
            + w[FFN_B2:FFN_B2 + 1, :])                          # (B, 128); cols 32:128 == 0


def ua_model2_kernel(img_ref, txt_ref, wimg_ref, wtxt_ref,
                     gsa1_ref, ffn1_ref, gsa2_ref, ffn2_ref, out_ref):
    # Input projection.  torch.cat(fc_img(img), fc_txt(txt)) is folded into two
    # column-split weights (no in-kernel concatenate).  The big image weight is
    # bf16 and the image input is cast to bf16 here -> native bf16 MXU matmul
    # with f32 accumulation; everything downstream stays f32.
    img_bf = img_ref[...].astype(jnp.bfloat16)
    z = (jnp.dot(img_bf, wimg_ref[...], preferred_element_type=jnp.float32)
         + jnp.dot(txt_ref[...], wtxt_ref[0:TXT_LEN, :],
                   preferred_element_type=jnp.float32)
         + wtxt_ref[TXT_LEN:TXT_LEN + 1, :])                    # (B, 32)

    x = _ffn(z, _gsa(z, gsa1_ref), ffn1_ref)[:, 0:D]            # (B, 32)
    x = _ffn(x, _gsa(x, gsa2_ref), ffn2_ref)[:, 0:D]            # (B, 32)

    # Output head + log_softmax over the lane-dense, 128-padded class dim.
    # Padded lanes carry bias -1e30 -> exp underflows to exactly 0.
    logits = (jnp.dot(x, ffn2_ref[HEAD_W:HEAD_W + D, :],
                      preferred_element_type=jnp.float32)
              + ffn2_ref[HEAD_B:HEAD_B + 1, :])                 # (B, 128)
    m = jnp.max(logits, axis=1, keepdims=True)
    lse = m + jnp.log(jnp.sum(jnp.exp(logits - m), axis=1, keepdims=True))
    out_ref[...] = logits - lse


# --------------------------------- wrapper -------------------------------------

def _cost_estimate(B):
    mm = lambda m, k, n: 2 * m * k * n
    gsa = mm(B, D, 128) + mm(B, 2 * D, 128) + mm(B, D, 128) + 2 * mm(B, B, D)
    ffn = 2 * mm(B, D, 4 * D) + mm(B, 4 * D, 4 * D)
    flops = (mm(B, IMG_LEN, D) + mm(B, TXT_LEN, D) + 2 * (gsa + ffn)
             + mm(B, D, CLS_PAD))
    trans = 2 * (B * D + B * B) + B * CLS_PAD
    bytes_acc = (B * IMG_LEN * 4 + B * TXT_LEN * 4
                 + IMG_LEN * D * 2 + (TXT_LEN + 1) * D * 4
                 + 2 * GSA_ROWS * 128 * 4 + FFN_ROWS * 128 * 4
                 + FFN2_ROWS * 128 * 4 + B * CLS_PAD * 4)
    return pl.CostEstimate(flops=flops, transcendentals=trans,
                           bytes_accessed=bytes_acc)


@jax.jit
def ua_model2(inp_img, inp_txt, params):
    """Returns lane-dense (B, 128) log-probs; real classes are columns 0:50."""
    B = inp_img.shape[0]
    args = (inp_img, inp_txt) + tuple(params)
    # Single grid-less call: all packed weight slabs (~0.5 MB) plus the whole
    # batch stay VMEM-resident for the entire forward pass.
    # TODO(synk): at large B add a "parallel" B-grid on the input projection
    # (and an online flattened softmax) to overlap the inp_img DMA and to stay
    # under the v7x 64 MiB VMEM ceiling / use both v7x TensorCores.
    return pl.pallas_call(
        ua_model2_kernel,
        out_shape=jax.ShapeDtypeStruct((B, CLS_PAD), jnp.float32),
        in_specs=[pl.BlockSpec(memory_space=pltpu.MemorySpace.VMEM)] * len(args),
        out_specs=pl.BlockSpec(memory_space=pltpu.MemorySpace.VMEM),
        compiler_params=pltpu.CompilerParams(vmem_limit_bytes=8 * 1024 * 1024),
        cost_estimate=_cost_estimate(B),
    )(*args)


# ----------------------- parameter construction (synthetic) --------------------

def make_raw_params(key):
    """Deterministic synthetic weights with the shapes implied by __init__.

    Weights are stored in JAX (in, out) orientation; biases as 1-D (out,).
    """
    keys = jax.random.split(key, 64)
    ki = iter(keys)

    def lin(fin, fout):
        w = jax.random.normal(next(ki), (fin, fout), jnp.float32) / np.sqrt(fin)
        b = 0.02 * jax.random.normal(next(ki), (fout,), jnp.float32)
        return (w, b)

    def gsa():
        return dict(v=lin(D, D), k=lin(D, D), q=lin(D, D),
                    hk=lin(D, D), hq=lin(D, D), hkq=lin(D, D))

    def ffn():
        return dict(fc1=lin(2 * D, 4 * D), fc2=lin(4 * D, D))

    return dict(img=lin(IMG_LEN, H), txt=lin(TXT_LEN, H),
                gsa1=gsa(), ffn1=ffn(), gsa2=gsa(), ffn2=ffn(),
                out=lin(D, N_CLASSES))


def _gsa_slab(g):
    (wv, bv), (wk, bk), (wq, bq) = g["v"], g["k"], g["q"]
    (whk, bhk), (whq, bhq), (whkq, bhkq) = g["hk"], g["hq"], g["hkq"]
    slab = jnp.zeros((GSA_ROWS, 128), jnp.float32)
    slab = (slab.at[0:D, 0:D].set(wv)
                .at[0:D, D:2 * D].set(wk)
                .at[0:D, 2 * D:3 * D].set(wq)
                .at[GSA_WH:GSA_WH + D, 0:D].set(whk)
                .at[GSA_WH + D:GSA_WH + 2 * D, D:2 * D].set(whq)
                .at[GSA_WHKQ:GSA_WHKQ + D, 0:D].set(whkq)
                .at[GSA_BVKQ, 0:D].set(bv)
                .at[GSA_BVKQ, D:2 * D].set(bk)
                .at[GSA_BVKQ, 2 * D:3 * D].set(bq)
                .at[GSA_BH, 0:D].set(bhk)
                .at[GSA_BH, D:2 * D].set(bhq)
                .at[GSA_BHKQ, 0:D].set(bhkq))
    return slab


def _ffn_slab(f, head=None):
    rows = FFN2_ROWS if head is not None else FFN_ROWS
    w1, b1 = f["fc1"]                    # (64, 128), (128,)
    w2, b2 = f["fc2"]                    # (128, 32), (32,)
    slab = jnp.zeros((rows, 128), jnp.float32)
    slab = (slab.at[FFN_W1A:FFN_W1A + D, :].set(w1[:D, :])
                .at[FFN_W1B:FFN_W1B + D, :].set(w1[D:, :])
                .at[FFN_W2:FFN_W2 + 4 * D, 0:D].set(w2)
                .at[FFN_B1, :].set(b1)
                .at[FFN_B2, 0:D].set(b2))
    if head is not None:
        wo, bo = head                    # (32, 50), (50,)
        slab = (slab.at[HEAD_W:HEAD_W + D, 0:N_CLASSES].set(wo)
                    .at[HEAD_B, :].set(-1e30)
                    .at[HEAD_B, 0:N_CLASSES].set(bo))
    return slab


def pack_params(raw):
    """Pack the 39 raw tensors into 6 lane-dense slabs (2 bf16/f32 projection
    weights + 2 GSA slabs + 2 FFN slabs, head folded into the last one)."""
    w_img, b_img = raw["img"]
    w_txt, b_txt = raw["txt"]
    # Image projection weight: columns 0:16 real, 16:32 zero; stored bf16.
    w_img_slab = (jnp.zeros((IMG_LEN, D), jnp.float32)
                  .at[:, 0:H].set(w_img)).astype(jnp.bfloat16)
    # Text projection weight (columns 16:32 real) with the combined bias b_z
    # appended as the final row; kept f32, K=300 unpadded (Mosaic masks it).
    w_txt_slab = (jnp.zeros((TXT_LEN + 1, D), jnp.float32)
                  .at[0:TXT_LEN, H:D].set(w_txt)
                  .at[TXT_LEN, 0:H].set(b_img)
                  .at[TXT_LEN, H:D].set(b_txt))
    return (w_img_slab, w_txt_slab,
            _gsa_slab(raw["gsa1"]), _ffn_slab(raw["ffn1"]),
            _gsa_slab(raw["gsa2"]), _ffn_slab(raw["ffn2"], head=raw["out"]))


# ----------------------------- pure-JAX reference ------------------------------

def reference(inp_img, inp_txt, raw, *, match_kernel_quant=False):
    """Reference forward pass.  With match_kernel_quant=True the image
    projection uses the same bf16-rounded weight/input the kernel uses, so the
    comparison isolates the kernel's structural correctness."""
    def lin(x, wb):
        w, b = wb
        return jnp.dot(x, w) + b

    def gsa(x, g):
        v = lin(x, g["v"]); k = lin(x, g["k"]); q = lin(x, g["q"])
        kq = jax.nn.sigmoid(lin(lin(k, g["hk"]) * lin(q, g["hq"]), g["hkq"]))
        k2 = k * kq
        q2 = q * kq
        scores = (k2 @ q2.T) / np.sqrt(D)
        a = jax.nn.softmax(scores.reshape(-1)).reshape(scores.shape)
        return a @ v

    def ffn(x1, x2, f):
        h = jnp.maximum(lin(jnp.concatenate([x1, x2], axis=1), f["fc1"]), 0.0)
        return lin(h, f["fc2"])

    w_img, b_img = raw["img"]
    img = inp_img
    if match_kernel_quant:
        w_img = w_img.astype(jnp.bfloat16).astype(jnp.float32)
        img = img.astype(jnp.bfloat16).astype(jnp.float32)

    with jax.default_matmul_precision("highest"):
        xi = jnp.dot(img, w_img) + b_img
        xt = lin(inp_txt, raw["txt"])
        z = jnp.concatenate([xi, xt], axis=1)
        x = ffn(z, gsa(z, raw["gsa1"]), raw["ffn1"])
        x = ffn(x, gsa(x, raw["gsa2"]), raw["ffn2"])
        logits = lin(x, raw["out"])
        return jax.nn.log_softmax(logits, axis=1)


if __name__ == "__main__":
    key = jax.random.PRNGKey(0)
    k_img, k_txt, k_par = jax.random.split(key, 3)

    B = 8
    inp_img = jax.random.normal(k_img, (B, IMG_LEN), jnp.float32)
    inp_txt = jax.random.normal(k_txt, (B, TXT_LEN), jnp.float32)

    raw = make_raw_params(k_par)
    params = pack_params(raw)

    out_padded = jax.block_until_ready(ua_model2(inp_img, inp_txt, params))
    out = np.asarray(out_padded[:, :N_CLASSES])       # slice at the consumer

    # (1) Strict structural check against a reference that uses the same
    #     bf16-rounded image-projection weights/inputs the kernel holds.
    ref_q = reference(inp_img, inp_txt, raw, match_kernel_quant=True)
    np.testing.assert_allclose(out, np.asarray(ref_q), rtol=2e-2, atol=2e-2)

    # (2) Fidelity check against the pure-f32 module semantics; the looser
    #     tolerance absorbs the intentional bf16 input-projection quantization.
    ref_f = reference(inp_img, inp_txt, raw, match_kernel_quant=False)
    np.testing.assert_allclose(out, np.asarray(ref_f), rtol=6e-2, atol=6e-2)

    print("KERNEL_OK")
</pallas_src>

<mosaic_0001>
module attributes {stable_mosaic.version = 11 : i64} {
  func.func @ua_model2_kernel(%arg0: memref<8x1024xf32, #tpu.memory_space<vmem>>, %arg1: memref<8x300xf32, #tpu.memory_space<vmem>>, %arg2: memref<1024x32xbf16, #tpu.memory_space<vmem>>, %arg3: memref<301x32xf32, #tpu.memory_space<vmem>>, %arg4: memref<131x128xf32, #tpu.memory_space<vmem>>, %arg5: memref<194x128xf32, #tpu.memory_space<vmem>>, %arg6: memref<131x128xf32, #tpu.memory_space<vmem>>, %arg7: memref<233x128xf32, #tpu.memory_space<vmem>>, %arg8: memref<8x128xf32, #tpu.memory_space<vmem>>) attributes {dimension_semantics = [], scalar_prefetch = 0 : i64, scratch_operands = 0 : i64, tpu.core_type = #tpu.core_type<tc>} {
    %c0 = arith.constant 0 : index
    %c0_0 = arith.constant 0 : index
    %0 = vector.load %arg0[%c0, %c0_0] : memref<8x1024xf32, #tpu.memory_space<vmem>>, vector<8x1024xf32>
    %1 = arith.truncf %0 : vector<8x1024xf32> to vector<8x1024xbf16>
    %c0_1 = arith.constant 0 : index
    %c0_2 = arith.constant 0 : index
    %2 = vector.load %arg2[%c0_1, %c0_2] : memref<1024x32xbf16, #tpu.memory_space<vmem>>, vector<1024x32xbf16>
    %cst = arith.constant dense<0.000000e+00> : vector<8x32xf32>
    %3 = tpu.matmul %1, %2, %cst {dimension_numbers = #tpu.dot_dimension_numbers<[1], [0], [0], [1], [0, 0, 1, 1], [], []>} : vector<8x1024xbf16>, vector<1024x32xbf16>, vector<8x32xf32> -> vector<8x32xf32>
    %c0_3 = arith.constant 0 : index
    %c0_4 = arith.constant 0 : index
    %4 = vector.load %arg1[%c0_3, %c0_4] : memref<8x300xf32, #tpu.memory_space<vmem>>, vector<8x300xf32>
    %c0_5 = arith.constant 0 : index
    %c0_6 = arith.constant 0 : index
    %5 = vector.load %arg3[%c0_5, %c0_6] : memref<301x32xf32, #tpu.memory_space<vmem>>, vector<300x32xf32>
    %cst_7 = arith.constant dense<0.000000e+00> : vector<8x32xf32>
    %6 = tpu.matmul %4, %5, %cst_7 {dimension_numbers = #tpu.dot_dimension_numbers<[1], [0], [0], [1], [0, 0, 1, 1], [], []>} : vector<8x300xf32>, vector<300x32xf32>, vector<8x32xf32> -> vector<8x32xf32>
    %7 = arith.addf %3, %6 : vector<8x32xf32>
    %c300 = arith.constant 300 : index
    %c0_8 = arith.constant 0 : index
    %8 = vector.load %arg3[%c300, %c0_8] : memref<301x32xf32, #tpu.memory_space<vmem>>, vector<1x32xf32>
    %9 = vector.broadcast %8 : vector<1x32xf32> to vector<8x32xf32>
    %10 = arith.addf %7, %9 : vector<8x32xf32>
    %c0_9 = arith.constant 0 : index
    %c0_10 = arith.constant 0 : index
    %11 = vector.load %arg4[%c0_9, %c0_10] : memref<131x128xf32, #tpu.memory_space<vmem>>, vector<32x128xf32>
    %cst_11 = arith.constant dense<0.000000e+00> : vector<8x128xf32>
    %12 = tpu.matmul %10, %11, %cst_11 {dimension_numbers = #tpu.dot_dimension_numbers<[1], [0], [0], [1], [0, 0, 1, 1], [], []>} : vector<8x32xf32>, vector<32x128xf32>, vector<8x128xf32> -> vector<8x128xf32>
    %c128 = arith.constant 128 : index
    %c0_12 = arith.constant 0 : index
    %13 = vector.load %arg4[%c128, %c0_12] : memref<131x128xf32, #tpu.memory_space<vmem>>, vector<1x128xf32>
    %14 = vector.broadcast %13 : vector<1x128xf32> to vector<8x128xf32>
    %15 = arith.addf %12, %14 : vector<8x128xf32>
    %16 = vector.extract_strided_slice %15 {offsets = [0, 0], sizes = [8, 32], strides = [1, 1]} : vector<8x128xf32> to vector<8x32xf32>
    %17 = vector.extract_strided_slice %15 {offsets = [0, 32], sizes = [8, 32], strides = [1, 1]} : vector<8x128xf32> to vector<8x32xf32>
    %18 = vector.extract_strided_slice %15 {offsets = [0, 64], sizes = [8, 32], strides = [1, 1]} : vector<8x128xf32> to vector<8x32xf32>
    %19 = vector.extract_strided_slice %15 {offsets = [0, 32], sizes = [8, 64], strides = [1, 1]} : vector<8x128xf32> to vector<8x64xf32>
    %c32 = arith.constant 32 : index
    %c0_13 = arith.constant 0 : index
    %20 = vector.load %arg4[%c32, %c0_13] : memref<131x128xf32, #tpu.memory_space<vmem>>, vector<64x128xf32>
    %cst_14 = arith.constant dense<0.000000e+00> : vector<8x128xf32>
    %21 = tpu.matmul %19, %20, %cst_14 {dimension_numbers = #tpu.dot_dimension_numbers<[1], [0], [0], [1], [0, 0, 1, 1], [], []>} : vector<8x64xf32>, vector<64x128xf32>, vector<8x128xf32> -> vector<8x128xf32>
    %c129 = arith.constant 129 : index
    %c0_15 = arith.constant 0 : index
    %22 = vector.load %arg4[%c129, %c0_15] : memref<131x128xf32, #tpu.memory_space<vmem>>, vector<1x128xf32>
    %23 = vector.broadcast %22 : vector<1x128xf32> to vector<8x128xf32>
    %24 = arith.addf %21, %23 : vector<8x128xf32>
    %25 = vector.extract_strided_slice %24 {offsets = [0, 0], sizes = [8, 32], strides = [1, 1]} : vector<8x128xf32> to vector<8x32xf32>
    %26 = vector.extract_strided_slice %24 {offsets = [0, 32], sizes = [8, 32], strides = [1, 1]} : vector<8x128xf32> to vector<8x32xf32>
    %27 = arith.mulf %25, %26 : vector<8x32xf32>
    %c96 = arith.constant 96 : index
    %c0_16 = arith.constant 0 : index
    %28 = vector.load %arg4[%c96, %c0_16] : memref<131x128xf32, #tpu.memory_space<vmem>>, vector<32x128xf32>
    %cst_17 = arith.constant dense<0.000000e+00> : vector<8x128xf32>
    %29 = tpu.matmul %27, %28, %cst_17 {dimension_numbers = #tpu.dot_dimension_numbers<[1], [0], [0], [1], [0, 0, 1, 1], [], []>} : vector<8x32xf32>, vector<32x128xf32>, vector<8x128xf32> -> vector<8x128xf32>
    %c130 = arith.constant 130 : index
    %c0_18 = arith.constant 0 : index
    %30 = vector.load %arg4[%c130, %c0_18] : memref<131x128xf32, #tpu.memory_space<vmem>>, vector<1x128xf32>
    %31 = vector.broadcast %30 : vector<1x128xf32> to vector<8x128xf32>
    %32 = arith.addf %29, %31 : vector<8x128xf32>
    %33 = vector.extract_strided_slice %32 {offsets = [0, 0], sizes = [8, 32], strides = [1, 1]} : vector<8x128xf32> to vector<8x32xf32>
    %cst_19 = arith.constant 0.000000e+00 : f32
    %34 = vector.broadcast %cst_19 : f32 to vector<8x32xf32>
    %35 = arith.subf %34, %33 : vector<8x32xf32>
    %36 = math.exp %35 : vector<8x32xf32>
    %cst_20 = arith.constant 1.000000e+00 : f32
    %37 = vector.broadcast %cst_20 : f32 to vector<8x32xf32>
    %38 = arith.addf %37, %36 : vector<8x32xf32>
    %39 = tpu.reciprocal %38 {approx = true} : vector<8x32xf32> -> vector<8x32xf32>
    %40 = arith.mulf %17, %39 : vector<8x32xf32>
    %41 = arith.mulf %18, %39 : vector<8x32xf32>
    %42 = tpu.transpose %41, [1, 0] : vector<8x32xf32> -> vector<32x8xf32>
    %cst_21 = arith.constant dense<0.000000e+00> : vector<8x8xf32>
    %43 = tpu.matmul %40, %42, %cst_21 {dimension_numbers = #tpu.dot_dimension_numbers<[1], [0], [0], [1], [0, 0, 1, 1], [], []>} : vector<8x32xf32>, vector<32x8xf32>, vector<8x8xf32> -> vector<8x8xf32>
    %cst_22 = arith.constant 0.176776692 : f32
    %44 = vector.broadcast %cst_22 : f32 to vector<8x8xf32>
    %45 = arith.mulf %43, %44 : vector<8x8xf32>
    %cst_23 = arith.constant dense<0xFF800000> : vector<8xf32>
    %46 = vector.multi_reduction <maximumf>, %45, %cst_23 [1] : vector<8x8xf32> to vector<8xf32>
    %47 = vector.shape_cast %46 : vector<8xf32> to vector<8x1xf32>
    %cst_24 = arith.constant dense<0xFF800000> : vector<1xf32>
    %48 = vector.multi_reduction <maximumf>, %47, %cst_24 [0] : vector<8x1xf32> to vector<1xf32>
    %49 = vector.shape_cast %48 : vector<1xf32> to vector<1x1xf32>
    %50 = vector.broadcast %49 : vector<1x1xf32> to vector<8x8xf32>
    %51 = arith.subf %45, %50 : vector<8x8xf32>
    %52 = math.exp %51 : vector<8x8xf32>
    %cst_25 = arith.constant dense<0.000000e+00> : vector<8xf32>
    %53 = vector.multi_reduction <add>, %52, %cst_25 [1] : vector<8x8xf32> to vector<8xf32>
    %54 = vector.shape_cast %53 : vector<8xf32> to vector<8x1xf32>
    %cst_26 = arith.constant dense<0.000000e+00> : vector<1xf32>
    %55 = vector.multi_reduction <add>, %54, %cst_26 [0] : vector<8x1xf32> to vector<1xf32>
    %56 = vector.shape_cast %55 : vector<1xf32> to vector<1x1xf32>
    %cst_27 = arith.constant dense<0.000000e+00> : vector<8x32xf32>
    %57 = tpu.matmul %52, %16, %cst_27 {dimension_numbers = #tpu.dot_dimension_numbers<[1], [0], [0], [1], [0, 0, 1, 1], [], []>} : vector<8x8xf32>, vector<8x32xf32>, vector<8x32xf32> -> vector<8x32xf32>
    %58 = tpu.reciprocal %56 {approx = true} : vector<1x1xf32> -> vector<1x1xf32>
    %59 = vector.broadcast %58 : vector<1x1xf32> to vector<8x32xf32>
    %60 = arith.mulf %57, %59 : vector<8x32xf32>
    %c0_28 = arith.constant 0 : index
    %c0_29 = arith.constant 0 : index
    %61 = vector.load %arg5[%c0_28, %c0_29] : memref<194x128xf32, #tpu.memory_space<vmem>>, vector<32x128xf32>
    %cst_30 = arith.constant dense<0.000000e+00> : vector<8x128xf32>
    %62 = tpu.matmul %10, %61, %cst_30 {dimension_numbers = #tpu.dot_dimension_numbers<[1], [0], [0], [1], [0, 0, 1, 1], [], []>} : vector<8x32xf32>, vector<32x128xf32>, vector<8x128xf32> -> vector<8x128xf32>
    %c32_31 = arith.constant 32 : index
    %c0_32 = arith.constant 0 : index
    %63 = vector.load %arg5[%c32_31, %c0_32] : memref<194x128xf32, #tpu.memory_space<vmem>>, vector<32x128xf32>
    %cst_33 = arith.constant dense<0.000000e+00> : vector<8x128xf32>
    %64 = tpu.matmul %60, %63, %cst_33 {dimension_numbers = #tpu.dot_dimension_numbers<[1], [0], [0], [1], [0, 0, 1, 1], [], []>} : vector<8x32xf32>, vector<32x128xf32>, vector<8x128xf32> -> vector<8x128xf32>
    %65 = arith.addf %62, %64 : vector<8x128xf32>
    %c192 = arith.constant 192 : index
    %c0_34 = arith.constant 0 : index
    %66 = vector.load %arg5[%c192, %c0_34] : memref<194x128xf32, #tpu.memory_space<vmem>>, vector<1x128xf32>
    %67 = vector.broadcast %66 : vector<1x128xf32> to vector<8x128xf32>
    %68 = arith.addf %65, %67 : vector<8x128xf32>
    %cst_35 = arith.constant 0.000000e+00 : f32
    %69 = vector.broadcast %cst_35 : f32 to vector<8x128xf32>
    %70 = arith.maximumf %68, %69 : vector<8x128xf32>
    %c64 = arith.constant 64 : index
    %c0_36 = arith.constant 0 : index
    %71 = vector.load %arg5[%c64, %c0_36] : memref<194x128xf32, #tpu.memory_space<vmem>>, vector<128x128xf32>
    %cst_37 = arith.constant dense<0.000000e+00> : vector<8x128xf32>
    %72 = tpu.matmul %70, %71, %cst_37 {dimension_numbers = #tpu.dot_dimension_numbers<[1], [0], [0], [1], [0, 0, 1, 1], [], []>} : vector<8x128xf32>, vector<128x128xf32>, vector<8x128xf32> -> vector<8x128xf32>
    %c193 = arith.constant 193 : index
    %c0_38 = arith.constant 0 : index
    %73 = vector.load %arg5[%c193, %c0_38] : memref<194x128xf32, #tpu.memory_space<vmem>>, vector<1x128xf32>
    %74 = vector.broadcast %73 : vector<1x128xf32> to vector<8x128xf32>
    %75 = arith.addf %72, %74 : vector<8x128xf32>
    %76 = vector.extract_strided_slice %75 {offsets = [0, 0], sizes = [8, 32], strides = [1, 1]} : vector<8x128xf32> to vector<8x32xf32>
    %c0_39 = arith.constant 0 : index
    %c0_40 = arith.constant 0 : index
    %77 = vector.load %arg6[%c0_39, %c0_40] : memref<131x128xf32, #tpu.memory_space<vmem>>, vector<32x128xf32>
    %cst_41 = arith.constant dense<0.000000e+00> : vector<8x128xf32>
    %78 = tpu.matmul %76, %77, %cst_41 {dimension_numbers = #tpu.dot_dimension_numbers<[1], [0], [0], [1], [0, 0, 1, 1], [], []>} : vector<8x32xf32>, vector<32x128xf32>, vector<8x128xf32> -> vector<8x128xf32>
    %c128_42 = arith.constant 128 : index
    %c0_43 = arith.constant 0 : index
    %79 = vector.load %arg6[%c128_42, %c0_43] : memref<131x128xf32, #tpu.memory_space<vmem>>, vector<1x128xf32>
    %80 = vector.broadcast %79 : vector<1x128xf32> to vector<8x128xf32>
    %81 = arith.addf %78, %80 : vector<8x128xf32>
    %82 = vector.extract_strided_slice %81 {offsets = [0, 0], sizes = [8, 32], strides = [1, 1]} : vector<8x128xf32> to vector<8x32xf32>
    %83 = vector.extract_strided_slice %81 {offsets = [0, 32], sizes = [8, 32], strides = [1, 1]} : vector<8x128xf32> to vector<8x32xf32>
    %84 = vector.extract_strided_slice %81 {offsets = [0, 64], sizes = [8, 32], strides = [1, 1]} : vector<8x128xf32> to vector<8x32xf32>
    %85 = vector.extract_strided_slice %81 {offsets = [0, 32], sizes = [8, 64], strides = [1, 1]} : vector<8x128xf32> to vector<8x64xf32>
    %c32_44 = arith.constant 32 : index
    %c0_45 = arith.constant 0 : index
    %86 = vector.load %arg6[%c32_44, %c0_45] : memref<131x128xf32, #tpu.memory_space<vmem>>, vector<64x128xf32>
    %cst_46 = arith.constant dense<0.000000e+00> : vector<8x128xf32>
    %87 = tpu.matmul %85, %86, %cst_46 {dimension_numbers = #tpu.dot_dimension_numbers<[1], [0], [0], [1], [0, 0, 1, 1], [], []>} : vector<8x64xf32>, vector<64x128xf32>, vector<8x128xf32> -> vector<8x128xf32>
    %c129_47 = arith.constant 129 : index
    %c0_48 = arith.constant 0 : index
    %88 = vector.load %arg6[%c129_47, %c0_48] : memref<131x128xf32, #tpu.memory_space<vmem>>, vector<1x128xf32>
    %89 = vector.broadcast %88 : vector<1x128xf32> to vector<8x128xf32>
    %90 = arith.addf %87, %89 : vector<8x128xf32>
    %91 = vector.extract_strided_slice %90 {offsets = [0, 0], sizes = [8, 32], strides = [1, 1]} : vector<8x128xf32> to vector<8x32xf32>
    %92 = vector.extract_strided_slice %90 {offsets = [0, 32], sizes = [8, 32], strides = [1, 1]} : vector<8x128xf32> to vector<8x32xf32>
    %93 = arith.mulf %91, %92 : vector<8x32xf32>
    %c96_49 = arith.constant 96 : index
    %c0_50 = arith.constant 0 : index
    %94 = vector.load %arg6[%c96_49, %c0_50] : memref<131x128xf32, #tpu.memory_space<vmem>>, vector<32x128xf32>
    %cst_51 = arith.constant dense<0.000000e+00> : vector<8x128xf32>
    %95 = tpu.matmul %93, %94, %cst_51 {dimension_numbers = #tpu.dot_dimension_numbers<[1], [0], [0], [1], [0, 0, 1, 1], [], []>} : vector<8x32xf32>, vector<32x128xf32>, vector<8x128xf32> -> vector<8x128xf32>
    %c130_52 = arith.constant 130 : index
    %c0_53 = arith.constant 0 : index
    %96 = vector.load %arg6[%c130_52, %c0_53] : memref<131x128xf32, #tpu.memory_space<vmem>>, vector<1x128xf32>
    %97 = vector.broadcast %96 : vector<1x128xf32> to vector<8x128xf32>
    %98 = arith.addf %95, %97 : vector<8x128xf32>
    %99 = vector.extract_strided_slice %98 {offsets = [0, 0], sizes = [8, 32], strides = [1, 1]} : vector<8x128xf32> to vector<8x32xf32>
    %cst_54 = arith.constant 0.000000e+00 : f32
    %100 = vector.broadcast %cst_54 : f32 to vector<8x32xf32>
    %101 = arith.subf %100, %99 : vector<8x32xf32>
    %102 = math.exp %101 : vector<8x32xf32>
    %cst_55 = arith.constant 1.000000e+00 : f32
    %103 = vector.broadcast %cst_55 : f32 to vector<8x32xf32>
    %104 = arith.addf %103, %102 : vector<8x32xf32>
    %105 = tpu.reciprocal %104 {approx = true} : vector<8x32xf32> -> vector<8x32xf32>
    %106 = arith.mulf %83, %105 : vector<8x32xf32>
    %107 = arith.mulf %84, %105 : vector<8x32xf32>
    %108 = tpu.transpose %107, [1, 0] : vector<8x32xf32> -> vector<32x8xf32>
    %cst_56 = arith.constant dense<0.000000e+00> : vector<8x8xf32>
    %109 = tpu.matmul %106, %108, %cst_56 {dimension_numbers = #tpu.dot_dimension_numbers<[1], [0], [0], [1], [0, 0, 1, 1], [], []>} : vector<8x32xf32>, vector<32x8xf32>, vector<8x8xf32> -> vector<8x8xf32>
    %cst_57 = arith.constant 0.176776692 : f32
    %110 = vector.broadcast %cst_57 : f32 to vector<8x8xf32>
    %111 = arith.mulf %109, %110 : vector<8x8xf32>
    %cst_58 = arith.constant dense<0xFF800000> : vector<8xf32>
    %112 = vector.multi_reduction <maximumf>, %111, %cst_58 [1] : vector<8x8xf32> to vector<8xf32>
    %113 = vector.shape_cast %112 : vector<8xf32> to vector<8x1xf32>
    %cst_59 = arith.constant dense<0xFF800000> : vector<1xf32>
    %114 = vector.multi_reduction <maximumf>, %113, %cst_59 [0] : vector<8x1xf32> to vector<1xf32>
    %115 = vector.shape_cast %114 : vector<1xf32> to vector<1x1xf32>
    %116 = vector.broadcast %115 : vector<1x1xf32> to vector<8x8xf32>
    %117 = arith.subf %111, %116 : vector<8x8xf32>
    %118 = math.exp %117 : vector<8x8xf32>
    %cst_60 = arith.constant dense<0.000000e+00> : vector<8xf32>
    %119 = vector.multi_reduction <add>, %118, %cst_60 [1] : vector<8x8xf32> to vector<8xf32>
    %120 = vector.shape_cast %119 : vector<8xf32> to vector<8x1xf32>
    %cst_61 = arith.constant dense<0.000000e+00> : vector<1xf32>
    %121 = vector.multi_reduction <add>, %120, %cst_61 [0] : vector<8x1xf32> to vector<1xf32>
    %122 = vector.shape_cast %121 : vector<1xf32> to vector<1x1xf32>
    %cst_62 = arith.constant dense<0.000000e+00> : vector<8x32xf32>
    %123 = tpu.matmul %118, %82, %cst_62 {dimension_numbers = #tpu.dot_dimension_numbers<[1], [0], [0], [1], [0, 0, 1, 1], [], []>} : vector<8x8xf32>, vector<8x32xf32>, vector<8x32xf32> -> vector<8x32xf32>
    %124 = tpu.reciprocal %122 {approx = true} : vector<1x1xf32> -> vector<1x1xf32>
    %125 = vector.broadcast %124 : vector<1x1xf32> to vector<8x32xf32>
    %126 = arith.mulf %123, %125 : vector<8x32xf32>
    %c0_63 = arith.constant 0 : index
    %c0_64 = arith.constant 0 : index
    %127 = vector.load %arg7[%c0_63, %c0_64] : memref<233x128xf32, #tpu.memory_space<vmem>>, vector<32x128xf32>
    %cst_65 = arith.constant dense<0.000000e+00> : vector<8x128xf32>
    %128 = tpu.matmul %76, %127, %cst_65 {dimension_numbers = #tpu.dot_dimension_numbers<[1], [0], [0], [1], [0, 0, 1, 1], [], []>} : vector<8x32xf32>, vector<32x128xf32>, vector<8x128xf32> -> vector<8x128xf32>
    %c32_66 = arith.constant 32 : index
    %c0_67 = arith.constant 0 : index
    %129 = vector.load %arg7[%c32_66, %c0_67] : memref<233x128xf32, #tpu.memory_space<vmem>>, vector<32x128xf32>
    %cst_68 = arith.constant dense<0.000000e+00> : vector<8x128xf32>
    %130 = tpu.matmul %126, %129, %cst_68 {dimension_numbers = #tpu.dot_dimension_numbers<[1], [0], [0], [1], [0, 0, 1, 1], [], []>} : vector<8x32xf32>, vector<32x128xf32>, vector<8x128xf32> -> vector<8x128xf32>
    %131 = arith.addf %128, %130 : vector<8x128xf32>
    %c192_69 = arith.constant 192 : index
    %c0_70 = arith.constant 0 : index
    %132 = vector.load %arg7[%c192_69, %c0_70] : memref<233x128xf32, #tpu.memory_space<vmem>>, vector<1x128xf32>
    %133 = vector.broadcast %132 : vector<1x128xf32> to vector<8x128xf32>
    %134 = arith.addf %131, %133 : vector<8x128xf32>
    %cst_71 = arith.constant 0.000000e+00 : f32
    %135 = vector.broadcast %cst_71 : f32 to vector<8x128xf32>
    %136 = arith.maximumf %134, %135 : vector<8x128xf32>
    %c64_72 = arith.constant 64 : index
    %c0_73 = arith.constant 0 : index
    %137 = vector.load %arg7[%c64_72, %c0_73] : memref<233x128xf32, #tpu.memory_space<vmem>>, vector<128x128xf32>
    %cst_74 = arith.constant dense<0.000000e+00> : vector<8x128xf32>
    %138 = tpu.matmul %136, %137, %cst_74 {dimension_numbers = #tpu.dot_dimension_numbers<[1], [0], [0], [1], [0, 0, 1, 1], [], []>} : vector<8x128xf32>, vector<128x128xf32>, vector<8x128xf32> -> vector<8x128xf32>
    %c193_75 = arith.constant 193 : index
    %c0_76 = arith.constant 0 : index
    %139 = vector.load %arg7[%c193_75, %c0_76] : memref<233x128xf32, #tpu.memory_space<vmem>>, vector<1x128xf32>
    %140 = vector.broadcast %139 : vector<1x128xf32> to vector<8x128xf32>
    %141 = arith.addf %138, %140 : vector<8x128xf32>
    %142 = vector.extract_strided_slice %141 {offsets = [0, 0], sizes = [8, 32], strides = [1, 1]} : vector<8x128xf32> to vector<8x32xf32>
    %c200 = arith.constant 200 : index
    %c0_77 = arith.constant 0 : index
    %143 = vector.load %arg7[%c200, %c0_77] : memref<233x128xf32, #tpu.memory_space<vmem>>, vector<32x128xf32>
    %cst_78 = arith.constant dense<0.000000e+00> : vector<8x128xf32>
    %144 = tpu.matmul %142, %143, %cst_78 {dimension_numbers = #tpu.dot_dimension_numbers<[1], [0], [0], [1], [0, 0, 1, 1], [], []>} : vector<8x32xf32>, vector<32x128xf32>, vector<8x128xf32> -> vector<8x128xf32>
    %c232 = arith.constant 232 : index
    %c0_79 = arith.constant 0 : index
    %145 = vector.load %arg7[%c232, %c0_79] : memref<233x128xf32, #tpu.memory_space<vmem>>, vector<1x128xf32>
    %146 = vector.broadcast %145 : vector<1x128xf32> to vector<8x128xf32>
    %147 = arith.addf %144, %146 : vector<8x128xf32>
    %cst_80 = arith.constant dense<0xFF800000> : vector<8xf32>
    %148 = vector.multi_reduction <maximumf>, %147, %cst_80 [1] : vector<8x128xf32> to vector<8xf32>
    %149 = vector.shape_cast %148 : vector<8xf32> to vector<8x1xf32>
    %150 = vector.broadcast %149 : vector<8x1xf32> to vector<8x128xf32>
    %151 = arith.subf %147, %150 : vector<8x128xf32>
    %152 = math.exp %151 : vector<8x128xf32>
    %cst_81 = arith.constant dense<0.000000e+00> : vector<8xf32>
    %153 = vector.multi_reduction <add>, %152, %cst_81 [1] : vector<8x128xf32> to vector<8xf32>
    %154 = vector.shape_cast %153 : vector<8xf32> to vector<8x1xf32>
    %155 = math.log %154 : vector<8x1xf32>
    %156 = arith.addf %149, %155 : vector<8x1xf32>
    %157 = vector.broadcast %156 : vector<8x1xf32> to vector<8x128xf32>
    %158 = arith.subf %147, %157 : vector<8x128xf32>
    %c0_82 = arith.constant 0 : index
    %c0_83 = arith.constant 0 : index
    %159 = vector.load %arg8[%c0_82, %c0_83] : memref<8x128xf32, #tpu.memory_space<vmem>>, vector<8x128xf32>
    tpu.vector_store %arg8[%c0_82, %c0_83], %158 {strides = array<i32>} : memref<8x128xf32, #tpu.memory_space<vmem>>, vector<8x128xf32>,
    return
  }
}

</mosaic_0001>

<llo_original>
// kernel: ua_model2.1
$region0: #{ua_model2.1}
  #allocation0 [shape = 'u32[]', space=smem, size = 0x4, offset = 0x4, fixed_abs, tag = 'smem constant byte address 0x4 - core index']
  #allocation1 [shape = 'u32[144,128]{1,0:T(1,128)}', space=vmem, size = 0x12000, scoped, tag = 'internal scratch']
  %s0 = inlined_call_operand.vmem [shape: f32[8,1024], index: 0, kind: input, shape index: {}]
  %s1 = inlined_call_operand.vmem [shape: f32[8,300], index: 1, kind: input, shape index: {}]
  %s2 = inlined_call_operand.vmem [shape: bf16[1024,32], index: 2, kind: input, shape index: {}]
  %s3 = inlined_call_operand.vmem [shape: f32[301,32], index: 3, kind: input, shape index: {}]
  %s4 = inlined_call_operand.vmem [shape: f32[131,128], index: 4, kind: input, shape index: {}]
  %s5 = inlined_call_operand.vmem [shape: f32[194,128], index: 5, kind: input, shape index: {}]
  %s6 = inlined_call_operand.vmem [shape: f32[131,128], index: 6, kind: input, shape index: {}]
  %s7 = inlined_call_operand.vmem [shape: f32[233,128], index: 7, kind: input, shape index: {}]
  %s8 = inlined_call_operand.hbm [shape: f32[8,128], index: 8, kind: output, shape index: {}]
  %s9 = sld [smem:[#allocation0]]
  $region42: #{ua_model2.1} parent=0
    _
  %s11 = ssub.s32 1, %s9
  %s12 = scalar_select 0, %s11, %s9
  $region1: #{ua_model2.1} parent=0
    #allocation2 [shape = 'u8[4096]{0}', space=vmem, size = 0x1000, scoped, tag = 'output window, operand 0, single buffered']
    #allocation3 [shape = 's32[1]{0}', space=sflag, size = 0x4, scoped, tag = 'scoped memory for ua_model2.1']
    %13 = vsyncpa [#allocation3], 0
    // Predicated region
    $region2: #{ua_model2.1} parent=1 // pred_check
      _
    $region3: #{ua_model2.1} parent=1 // pred_check_branch
      %15 = sbr.rel (0) target = $region5
    $region4: #{ua_model2.1} parent=1 // pred_region
      _
    $region5: #{ua_model2.1} parent=1 // pred_fallthru
      _
    // Predicated region
    $region6: #{ua_model2.1} parent=1 // pred_check
      _
    $region7: #{ua_model2.1} parent=1 // pred_check_branch
      %17 = sbr.rel (0) target = $region9
    $region8: #{ua_model2.1} parent=1 // pred_region
      _
    $region9: #{ua_model2.1} parent=1 // pred_fallthru
      _
    // Predicated region
    $region10: #{ua_model2.1} parent=1 // pred_check
      _
    $region11: #{ua_model2.1} parent=1 // pred_check_branch
      %19 = sbr.rel (0) target = $region13
    $region12: #{ua_model2.1} parent=1 // pred_region
      _
    $region13: #{ua_model2.1} parent=1 // pred_fallthru
      _
    // Predicated region
    $region14: #{ua_model2.1} parent=1 // pred_check
      _
    $region15: #{ua_model2.1} parent=1 // pred_check_branch
      %21 = sbr.rel (0) target = $region17
    $region16: #{ua_model2.1} parent=1 // pred_region
      _
    $region17: #{ua_model2.1} parent=1 // pred_fallthru
      _
    // Predicated region
    $region18: #{ua_model2.1} parent=1 // pred_check
      _
    $region19: #{ua_model2.1} parent=1 // pred_check_branch
      %23 = sbr.rel (0) target = $region21
    $region20: #{ua_model2.1} parent=1 // pred_region
      _
    $region21: #{ua_model2.1} parent=1 // pred_fallthru
      _
    // Predicated region
    $region22: #{ua_model2.1} parent=1 // pred_check
      _
    $region23: #{ua_model2.1} parent=1 // pred_check_branch
      %25 = sbr.rel (0) target = $region25
    $region24: #{ua_model2.1} parent=1 // pred_region
      _
    $region25: #{ua_model2.1} parent=1 // pred_fallthru
      _
    // Predicated region
    $region26: #{ua_model2.1} parent=1 // pred_check
      _
    $region27: #{ua_model2.1} parent=1 // pred_check_branch
      %27 = sbr.rel (0) target = $region29
    $region28: #{ua_model2.1} parent=1 // pred_region
      _
    $region29: #{ua_model2.1} parent=1 // pred_fallthru
      _
    // Predicated region
    $region30: #{ua_model2.1} parent=1 // pred_check
      _
    $region31: #{ua_model2.1} parent=1 // pred_check_branch
      %29 = sbr.rel (0) target = $region33
    $region32: #{ua_model2.1} parent=1 // pred_region
      _
    $region33: #{ua_model2.1} parent=1 // pred_fallthru
      _
    %v31 = vld [vmem:[%s0] sm:$0xff]
    %v32 = vld [vmem:[%s0 + $0x8] sm:$0xff]
    %v33 = vld [vmem:[%s0 + $0x10] sm:$0xff]
    %v34 = vld [vmem:[%s0 + $0x18] sm:$0xff]
    %v35 = vld [vmem:[%s0 + $0x20] sm:$0xff]
    %v36 = vld [vmem:[%s0 + $0x28] sm:$0xff]
    %v37 = vld [vmem:[%s0 + $0x30] sm:$0xff]
    %v38 = vld [vmem:[%s0 + $0x38] sm:$0xff]
    %v39 = vpack.c.bf16 %v31, %v31
    %v40 = vpack.c.bf16 %v32, %v32
    %v41 = vpack.c.bf16 %v33, %v33
    %v42 = vpack.c.bf16 %v34, %v34
    %v43 = vpack.c.bf16 %v35, %v35
    %v44 = vpack.c.bf16 %v36, %v36
    %v45 = vpack.c.bf16 %v37, %v37
    %v46 = vpack.c.bf16 %v38, %v38
    %v47 = vld [vmem:[%s2] sm:$0xf]
    %v48 = vld [vmem:[%s2 + $0x4] sm:$0xf]
    %v49 = vld [vmem:[%s2 + $0x8] sm:$0xf]
    %v50 = vld [vmem:[%s2 + $0xc] sm:$0xf]
    %v51 = vld [vmem:[%s2 + $0x10] sm:$0xf]
    %v52 = vld [vmem:[%s2 + $0x14] sm:$0xf]
    %v53 = vld [vmem:[%s2 + $0x18] sm:$0xf]
    %v54 = vld [vmem:[%s2 + $0x1c] sm:$0xf]
    %v55 = vld [vmem:[%s2 + $0x20] sm:$0xf]
    %v56 = vld [vmem:[%s2 + $0x24] sm:$0xf]
    %v57 = vld [vmem:[%s2 + $0x28] sm:$0xf]
    %v58 = vld [vmem:[%s2 + $0x2c] sm:$0xf]
    %v59 = vld [vmem:[%s2 + $0x30] sm:$0xf]
    %v60 = vld [vmem:[%s2 + $0x34] sm:$0xf]
    %v61 = vld [vmem:[%s2 + $0x38] sm:$0xf]
    %v62 = vld [vmem:[%s2 + $0x3c] sm:$0xf]
    %v63 = vld [vmem:[%s2 + $0x40] sm:$0xf]
    %v64 = vld [vmem:[%s2 + $0x44] sm:$0xf]
    %v65 = vld [vmem:[%s2 + $0x48] sm:$0xf]
    %v66 = vld [vmem:[%s2 + $0x4c] sm:$0xf]
    %v67 = vld [vmem:[%s2 + $0x50] sm:$0xf]
    %v68 = vld [vmem:[%s2 + $0x54] sm:$0xf]
    %v69 = vld [vmem:[%s2 + $0x58] sm:$0xf]
    %v70 = vld [vmem:[%s2 + $0x5c] sm:$0xf]
    %v71 = vld [vmem:[%s2 + $0x60] sm:$0xf]
    %v72 = vld [vmem:[%s2 + $0x64] sm:$0xf]
    %v73 = vld [vmem:[%s2 + $0x68] sm:$0xf]
    %v74 = vld [vmem:[%s2 + $0x6c] sm:$0xf]
    %v75 = vld [vmem:[%s2 + $0x70] sm:$0xf]
    %v76 = vld [vmem:[%s2 + $0x74] sm:$0xf]
    %v77 = vld [vmem:[%s2 + $0x78] sm:$0xf]
    %v78 = vld [vmem:[%s2 + $0x7c] sm:$0xf]
    %v79 = vld [vmem:[%s2 + $0x80] sm:$0xf]
    %v80 = vld [vmem:[%s2 + $0x84] sm:$0xf]
    %v81 = vld [vmem:[%s2 + $0x88] sm:$0xf]
    %v82 = vld [vmem:[%s2 + $0x8c] sm:$0xf]
    %v83 = vld [vmem:[%s2 + $0x90] sm:$0xf]
    %v84 = vld [vmem:[%s2 + $0x94] sm:$0xf]
    %v85 = vld [vmem:[%s2 + $0x98] sm:$0xf]
    %v86 = vld [vmem:[%s2 + $0x9c] sm:$0xf]
    %v87 = vld [vmem:[%s2 + $0xa0] sm:$0xf]
    %v88 = vld [vmem:[%s2 + $0xa4] sm:$0xf]
    %v89 = vld [vmem:[%s2 + $0xa8] sm:$0xf]
    %v90 = vld [vmem:[%s2 + $0xac] sm:$0xf]
    %v91 = vld [vmem:[%s2 + $0xb0] sm:$0xf]
    %v92 = vld [vmem:[%s2 + $0xb4] sm:$0xf]
    %v93 = vld [vmem:[%s2 + $0xb8] sm:$0xf]
    %v94 = vld [vmem:[%s2 + $0xbc] sm:$0xf]
    %v95 = vld [vmem:[%s2 + $0xc0] sm:$0xf]
    %v96 = vld [vmem:[%s2 + $0xc4] sm:$0xf]
    %v97 = vld [vmem:[%s2 + $0xc8] sm:$0xf]
    %v98 = vld [vmem:[%s2 + $0xcc] sm:$0xf]
    %v99 = vld [vmem:[%s2 + $0xd0] sm:$0xf]
    %v100 = vld [vmem:[%s2 + $0xd4] sm:$0xf]
    %v101 = vld [vmem:[%s2 + $0xd8] sm:$0xf]
    %v102 = vld [vmem:[%s2 + $0xdc] sm:$0xf]
    %v103 = vld [vmem:[%s2 + $0xe0] sm:$0xf]
    %v104 = vld [vmem:[%s2 + $0xe4] sm:$0xf]
    %v105 = vld [vmem:[%s2 + $0xe8] sm:$0xf]
    %v106 = vld [vmem:[%s2 + $0xec] sm:$0xf]
    %v107 = vld [vmem:[%s2 + $0xf0] sm:$0xf]
    %v108 = vld [vmem:[%s2 + $0xf4] sm:$0xf]
    %v109 = vld [vmem:[%s2 + $0xf8] sm:$0xf]
    %v110 = vld [vmem:[%s2 + $0xfc] sm:$0xf]
    %v111 = vld [vmem:[%s2 + $0x100] sm:$0xf]
    %v112 = vld [vmem:[%s2 + $0x104] sm:$0xf]
    %v113 = vld [vmem:[%s2 + $0x108] sm:$0xf]
    %v114 = vld [vmem:[%s2 + $0x10c] sm:$0xf]
    %v115 = vld [vmem:[%s2 + $0x110] sm:$0xf]
    %v116 = vld [vmem:[%s2 + $0x114] sm:$0xf]
    %v117 = vld [vmem:[%s2 + $0x118] sm:$0xf]
    %v118 = vld [vmem:[%s2 + $0x11c] sm:$0xf]
    %v119 = vld [vmem:[%s2 + $0x120] sm:$0xf]
    %v120 = vld [vmem:[%s2 + $0x124] sm:$0xf]
    %v121 = vld [vmem:[%s2 + $0x128] sm:$0xf]
    %v122 = vld [vmem:[%s2 + $0x12c] sm:$0xf]
    %v123 = vld [vmem:[%s2 + $0x130] sm:$0xf]
    %v124 = vld [vmem:[%s2 + $0x134] sm:$0xf]
    %v125 = vld [vmem:[%s2 + $0x138] sm:$0xf]
    %v126 = vld [vmem:[%s2 + $0x13c] sm:$0xf]
    %v127 = vld [vmem:[%s2 + $0x140] sm:$0xf]
    %v128 = vld [vmem:[%s2 + $0x144] sm:$0xf]
    %v129 = vld [vmem:[%s2 + $0x148] sm:$0xf]
    %v130 = vld [vmem:[%s2 + $0x14c] sm:$0xf]
    %v131 = vld [vmem:[%s2 + $0x150] sm:$0xf]
    %v132 = vld [vmem:[%s2 + $0x154] sm:$0xf]
    %v133 = vld [vmem:[%s2 + $0x158] sm:$0xf]
    %v134 = vld [vmem:[%s2 + $0x15c] sm:$0xf]
    %v135 = vld [vmem:[%s2 + $0x160] sm:$0xf]
    %v136 = vld [vmem:[%s2 + $0x164] sm:$0xf]
    %v137 = vld [vmem:[%s2 + $0x168] sm:$0xf]
    %v138 = vld [vmem:[%s2 + $0x16c] sm:$0xf]
    %v139 = vld [vmem:[%s2 + $0x170] sm:$0xf]
    %v140 = vld [vmem:[%s2 + $0x174] sm:$0xf]
    %v141 = vld [vmem:[%s2 + $0x178] sm:$0xf]
    %v142 = vld [vmem:[%s2 + $0x17c] sm:$0xf]
    %v143 = vld [vmem:[%s2 + $0x180] sm:$0xf]
    %v144 = vld [vmem:[%s2 + $0x184] sm:$0xf]
    %v145 = vld [vmem:[%s2 + $0x188] sm:$0xf]
    %v146 = vld [vmem:[%s2 + $0x18c] sm:$0xf]
    %v147 = vld [vmem:[%s2 + $0x190] sm:$0xf]
    %v148 = vld [vmem:[%s2 + $0x194] sm:$0xf]
    %v149 = vld [vmem:[%s2 + $0x198] sm:$0xf]
    %v150 = vld [vmem:[%s2 + $0x19c] sm:$0xf]
    %v151 = vld [vmem:[%s2 + $0x1a0] sm:$0xf]
    %v152 = vld [vmem:[%s2 + $0x1a4] sm:$0xf]
    %v153 = vld [vmem:[%s2 + $0x1a8] sm:$0xf]
    %v154 = vld [vmem:[%s2 + $0x1ac] sm:$0xf]
    %v155 = vld [vmem:[%s2 + $0x1b0] sm:$0xf]
    %v156 = vld [vmem:[%s2 + $0x1b4] sm:$0xf]
    %v157 = vld [vmem:[%s2 + $0x1b8] sm:$0xf]
    %v158 = vld [vmem:[%s2 + $0x1bc] sm:$0xf]
    %v159 = vld [vmem:[%s2 + $0x1c0] sm:$0xf]
    %v160 = vld [vmem:[%s2 + $0x1c4] sm:$0xf]
    %v161 = vld [vmem:[%s2 + $0x1c8] sm:$0xf]
    %v162 = vld [vmem:[%s2 + $0x1cc] sm:$0xf]
    %v163 = vld [vmem:[%s2 + $0x1d0] sm:$0xf]
    %v164 = vld [vmem:[%s2 + $0x1d4] sm:$0xf]
    %v165 = vld [vmem:[%s2 + $0x1d8] sm:$0xf]
    %v166 = vld [vmem:[%s2 + $0x1dc] sm:$0xf]
    %v167 = vld [vmem:[%s2 + $0x1e0] sm:$0xf]
    %v168 = vld [vmem:[%s2 + $0x1e4] sm:$0xf]
    %v169 = vld [vmem:[%s2 + $0x1e8] sm:$0xf]
    %v170 = vld [vmem:[%s2 + $0x1ec] sm:$0xf]
    %v171 = vld [vmem:[%s2 + $0x1f0] sm:$0xf]
    %v172 = vld [vmem:[%s2 + $0x1f4] sm:$0xf]
    %v173 = vld [vmem:[%s2 + $0x1f8] sm:$0xf]
    %v174 = vld [vmem:[%s2 + $0x1fc] sm:$0xf]
    %v175 = vld [vmem:[%s1] sm:$0xff]
    %v176 = vld [vmem:[%s1 + $0x8] sm:$0xff]
    %v177 = vld [vmem:[%s1 + $0x10] sm:$0xff]
    %v178 = vld [vmem:[%s3] sm:$0xff]
    %v179 = vld [vmem:[%s3 + $0x8] sm:$0xff]
    %v180 = vld [vmem:[%s3 + $0x10] sm:$0xff]
    %v181 = vld [vmem:[%s3 + $0x18] sm:$0xff]
    %v182 = vld [vmem:[%s3 + $0x20] sm:$0xff]
    %v183 = vld [vmem:[%s3 + $0x28] sm:$0xff]
    %v184 = vld [vmem:[%s3 + $0x30] sm:$0xff]
    %v185 = vld [vmem:[%s3 + $0x38] sm:$0xff]
    %v186 = vld [vmem:[%s3 + $0x40] sm:$0xff]
    %v187 = vld [vmem:[%s3 + $0x48] sm:$0xff]
    %v188 = vld [vmem:[%s3 + $0x50] sm:$0xff]
    %v189 = vld [vmem:[%s3 + $0x58] sm:$0xff]
    %v190 = vld [vmem:[%s3 + $0x60] sm:$0xff]
    %v191 = vld [vmem:[%s3 + $0x68] sm:$0xff]
    %v192 = vld [vmem:[%s3 + $0x70] sm:$0xff]
    %v193 = vld [vmem:[%s3 + $0x78] sm:$0xff]
    %v194 = vld [vmem:[%s3 + $0x80] sm:$0xff]
    %v195 = vld [vmem:[%s3 + $0x88] sm:$0xff]
    %v196 = vld [vmem:[%s3 + $0x90] sm:$0xff]
    %v197 = vld [vmem:[%s3 + $0x98] sm:$0xff]
    %v198 = vld [vmem:[%s3 + $0xa0] sm:$0xff]
    %v199 = vld [vmem:[%s3 + $0xa8] sm:$0xff]
    %v200 = vld [vmem:[%s3 + $0xb0] sm:$0xff]
    %v201 = vld [vmem:[%s3 + $0xb8] sm:$0xff]
    %v202 = vld [vmem:[%s3 + $0xc0] sm:$0xff]
    %v203 = vld [vmem:[%s3 + $0xc8] sm:$0xff]
    %v204 = vld [vmem:[%s3 + $0xd0] sm:$0xff]
    %v205 = vld [vmem:[%s3 + $0xd8] sm:$0xff]
    %v206 = vld [vmem:[%s3 + $0xe0] sm:$0xff]
    %v207 = vld [vmem:[%s3 + $0xe8] sm:$0xff]
    %v208 = vld [vmem:[%s3 + $0xf0] sm:$0xff]
    %v209 = vld [vmem:[%s3 + $0xf8] sm:$0xff]
    %v210 = vld [vmem:[%s3 + $0x100] sm:$0xff]
    %v211 = vld [vmem:[%s3 + $0x108] sm:$0xff]
    %v212 = vld [vmem:[%s3 + $0x110] sm:$0xff]
    %v213 = vld [vmem:[%s3 + $0x118] sm:$0xff]
    %v214 = vld [vmem:[%s3 + $0x120] sm:$0xff]
    %v215 = vld [vmem:[%s3 + $0x128] sm:$0xf]
    %vm216 = vcmask 359424
    %v218 = vsel %vm216, %v177, 0
    %vm220 = vcmask 1043456
    %v222 = vsel %vm220, %v215, 0
    %224 = vmatprep.subr.mxu0 0.0
    %225 = vmatpush1.msra.mxu0 %v193
    %226 = vmatprep.subr.mxu0 0.0
    %227 = vmatpush1.msra.mxu0 %v192
    %228 = vmatprep.subr.mxu0 0.0
    %229 = vmatpush1.msra.mxu0 %v191
    %230 = vmatprep.subr.mxu0 0.0
    %231 = vmatpush1.msra.mxu0 %v190
    %232 = vmatprep.subr.mxu0 0.0
    %233 = vmatpush1.msra.mxu0 %v189
    %234 = vmatprep.subr.mxu0 0.0
    %235 = vmatpush1.msra.mxu0 %v188
    %236 = vmatprep.subr.mxu0 0.0
    %237 = vmatpush1.msra.mxu0 %v187
    %238 = vmatprep.subr.mxu0 0.0
    %239 = vmatpush1.msra.mxu0 %v186
    %240 = vmatprep.subr.mxu0 0.0
    %241 = vmatpush1.msra.mxu0 %v185
    %242 = vmatprep.subr.mxu0 0.0
    %243 = vmatpush1.msra.mxu0 %v184
    %244 = vmatprep.subr.mxu0 0.0
    %245 = vmatpush1.msra.mxu0 %v183
    %246 = vmatprep.subr.mxu0 0.0
    %247 = vmatpush1.msra.mxu0 %v182
    %248 = vmatprep.subr.mxu0 0.0
    %249 = vmatpush1.msra.mxu0 %v181
    %250 = vmatprep.subr.mxu0 0.0
    %251 = vmatpush1.msra.mxu0 %v180
    %252 = vmatprep.subr.mxu0 0.0
    %253 = vmatpush1.msra.mxu0 %v179
    %254 = vmatprep.subr.mxu0 0.0
    %255 = vmatpush1.msra.mxu0 %v178
    %256 = vmatprep.subr.mxu0 0.0
    %257 = vmatpush2.msra.mxu0 %v209
    %258 = vmatprep.subr.mxu0 0.0
    %259 = vmatpush2.msra.mxu0 %v208
    %260 = vmatprep.subr.mxu0 0.0
    %261 = vmatpush2.msra.mxu0 %v207
    %262 = vmatprep.subr.mxu0 0.0
    %263 = vmatpush2.msra.mxu0 %v206
    %264 = vmatprep.subr.mxu0 0.0
    %265 = vmatpush2.msra.mxu0 %v205
    %266 = vmatprep.subr.mxu0 0.0
    %267 = vmatpush2.msra.mxu0 %v204
    %268 = vmatprep.subr.mxu0 0.0
    %269 = vmatpush2.msra.mxu0 %v203
    %270 = vmatprep.subr.mxu0 0.0
    %271 = vmatpush2.msra.mxu0 %v202
    %272 = vmatprep.subr.mxu0 0.0
    %273 = vmatpush2.msra.mxu0 %v201
    %274 = vmatprep.subr.mxu0 0.0
    %275 = vmatpush2.msra.mxu0 %v200
    %276 = vmatprep.subr.mxu0 0.0
    %277 = vmatpush2.msra.mxu0 %v199
    %278 = vmatprep.subr.mxu0 0.0
    %279 = vmatpush2.msra.mxu0 %v198
    %280 = vmatprep.subr.mxu0 0.0
    %281 = vmatpush2.msra.mxu0 %v197
    %282 = vmatprep.subr.mxu0 0.0
    %283 = vmatpush2.msra.mxu0 %v196
    %284 = vmatprep.subr.mxu0 0.0
    %285 = vmatpush2.msra.mxu0 %v195
    %286 = vmatprep.subr.mxu0 0.0
    %287 = vmatpush2.msra.mxu0 %v194
    %288 = vmatprep.mubr.f32.mxu0 %v176
    %289 = vmatmul.mubr.f32.gmra.mxu0 %v175
    %v290 = vpop.f32.mrf.mxu0
    %v291 = vadd.f32 0.0, %v290
    %v292 = vpop.f32.mrf.mxu0
    %293 = vdwg.mxu0
    %294 = vmatprep.subr.mxu0 0.0
    %295 = vmatpush1.msra.mxu0 0.0
    %296 = vmatprep.subr.mxu0 0.0
    %297 = vmatpush1.msra.mxu0 0.0
    %298 = vmatprep.subr.mxu0 0.0
    %299 = vmatpush1.msra.mxu0 0.0
    %300 = vmatprep.subr.mxu0 0.0
    %301 = vmatpush1.msra.mxu0 0.0
    %302 = vmatprep.subr.mxu0 0.0
    %303 = vmatpush1.msra.mxu0 0.0
    %304 = vmatprep.subr.mxu0 0.0
    %305 = vmatpush1.msra.mxu0 0.0
    %306 = vmatprep.subr.mxu0 0.0
    %307 = vmatpush1.msra.mxu0 0.0
    %308 = vmatprep.subr.mxu0 0.0
    %309 = vmatpush1.msra.mxu0 0.0
    %310 = vmatprep.subr.mxu0 0.0
    %311 = vmatpush1.msra.mxu0 0.0
    %312 = vmatprep.subr.mxu0 0.0
    %313 = vmatpush1.msra.mxu0 0.0
    %314 = vmatprep.subr.mxu0 0.0
    %315 = vmatpush1.msra.mxu0 %v222
    %316 = vmatprep.subr.mxu0 0.0
    %317 = vmatpush1.msra.mxu0 %v214
    %318 = vmatprep.subr.mxu0 0.0
    %319 = vmatpush1.msra.mxu0 %v213
    %320 = vmatprep.subr.mxu0 0.0
    %321 = vmatpush1.msra.mxu0 %v212
    %322 = vmatprep.subr.mxu0 0.0
    %323 = vmatpush1.msra.mxu0 %v211
    %324 = vmatprep.subr.mxu0 0.0
    %325 = vmatpush1.msra.mxu0 %v210
    %326 = vmatprep.subr.mxu0 0.0
    %327 = vmatpush2.msra.mxu0 0.0
    %328 = vmatprep.subr.mxu0 0.0
    %329 = vmatpush2.msra.mxu0 0.0
    %330 = vmatprep.subr.mxu0 0.0
    %331 = vmatpush2.msra.mxu0 0.0
    %332 = vmatprep.subr.mxu0 0.0
    %333 = vmatpush2.msra.mxu0 0.0
    %334 = vmatprep.subr.mxu0 0.0
    %335 = vmatpush2.msra.mxu0 0.0
    %336 = vmatprep.subr.mxu0 0.0
    %337 = vmatpush2.msra.mxu0 0.0
    %338 = vmatprep.subr.mxu0 0.0
    %339 = vmatpush2.msra.mxu0 0.0
    %340 = vmatprep.subr.mxu0 0.0
    %341 = vmatpush2.msra.mxu0 0.0
    %342 = vmatprep.subr.mxu0 0.0
    %343 = vmatpush2.msra.mxu0 0.0
    %344 = vmatprep.subr.mxu0 0.0
    %345 = vmatpush2.msra.mxu0 0.0
    %346 = vmatprep.subr.mxu0 0.0
    %347 = vmatpush2.msra.mxu0 0.0
    %348 = vmatprep.subr.mxu0 0.0
    %349 = vmatpush2.msra.mxu0 0.0
    %350 = vmatprep.subr.mxu0 0.0
    %351 = vmatpush2.msra.mxu0 0.0
    %352 = vmatprep.subr.mxu0 0.0
    %353 = vmatpush2.msra.mxu0 0.0
    %354 = vmatprep.subr.mxu0 0.0
    %355 = vmatpush2.msra.mxu0 0.0
    %356 = vmatprep.subr.mxu0 0.0
    %357 = vmatpush2.msra.mxu0 0.0
    %358 = vmatprep.mubr.f32.mxu0 0.0
    %359 = vmatmul.mubr.f32.gmra.mxu0 %v218
    %v360 = vpop.f32.mrf.mxu0
    %v361 = vadd.f32 %v291, %v360
    %v362 = vpop.f32.mrf.mxu0
    %363 = vdwg.mxu0
    %v492 = vunpack.c.l.b16 %v47
    %v493 = vunpack.c.l.b16 %v48
    %v494 = vunpack.c.l.b16 %v49
    %v495 = vunpack.c.l.b16 %v50
    %v496 = vunpack.c.l.b16 %v51
    %v497 = vunpack.c.l.b16 %v52
    %v498 = vunpack.c.l.b16 %v53
    %v499 = vunpack.c.l.b16 %v54
    %v500 = vunpack.c.l.b16 %v55
    %v501 = vunpack.c.l.b16 %v56
    %v502 = vunpack.c.l.b16 %v57
    %v503 = vunpack.c.l.b16 %v58
    %v504 = vunpack.c.l.b16 %v59
    %v505 = vunpack.c.l.b16 %v60
    %v506 = vunpack.c.l.b16 %v61
    %v507 = vunpack.c.l.b16 %v62
    %v508 = vunpack.c.l.b16 %v63
    %v509 = vunpack.c.l.b16 %v64
    %v510 = vunpack.c.l.b16 %v65
    %v511 = vunpack.c.l.b16 %v66
    %v512 = vunpack.c.l.b16 %v67
    %v513 = vunpack.c.l.b16 %v68
    %v514 = vunpack.c.l.b16 %v69
    %v515 = vunpack.c.l.b16 %v70
    %v516 = vunpack.c.l.b16 %v71
    %v517 = vunpack.c.l.b16 %v72
    %v518 = vunpack.c.l.b16 %v73
    %v519 = vunpack.c.l.b16 %v74
    %v520 = vunpack.c.l.b16 %v75
    %v521 = vunpack.c.l.b16 %v76
    %v522 = vunpack.c.l.b16 %v77
    %v523 = vunpack.c.l.b16 %v78
    %v524 = vunpack.c.l.b16 %v79
    %v525 = vunpack.c.l.b16 %v80
    %v526 = vunpack.c.l.b16 %v81
    %v527 = vunpack.c.l.b16 %v82
    %v528 = vunpack.c.l.b16 %v83
    %v529 = vunpack.c.l.b16 %v84
    %v530 = vunpack.c.l.b16 %v85
    %v531 = vunpack.c.l.b16 %v86
    %v532 = vunpack.c.l.b16 %v87
    %v533 = vunpack.c.l.b16 %v88
    %v534 = vunpack.c.l.b16 %v89
    %v535 = vunpack.c.l.b16 %v90
    %v536 = vunpack.c.l.b16 %v91
    %v537 = vunpack.c.l.b16 %v92
    %v538 = vunpack.c.l.b16 %v93
    %v539 = vunpack.c.l.b16 %v94
    %v540 = vunpack.c.l.b16 %v95
    %v541 = vunpack.c.l.b16 %v96
    %v542 = vunpack.c.l.b16 %v97
    %v543 = vunpack.c.l.b16 %v98
    %v544 = vunpack.c.l.b16 %v99
    %v545 = vunpack.c.l.b16 %v100
    %v546 = vunpack.c.l.b16 %v101
    %v547 = vunpack.c.l.b16 %v102
    %v548 = vunpack.c.l.b16 %v103
    %v549 = vunpack.c.l.b16 %v104
    %v550 = vunpack.c.l.b16 %v105
    %v551 = vunpack.c.l.b16 %v106
    %v552 = vunpack.c.l.b16 %v107
    %v553 = vunpack.c.l.b16 %v108
    %v554 = vunpack.c.l.b16 %v109
    %v555 = vunpack.c.l.b16 %v110
    %v556 = vunpack.c.l.b16 %v111
    %v557 = vunpack.c.l.b16 %v112
    %v558 = vunpack.c.l.b16 %v113
    %v559 = vunpack.c.l.b16 %v114
    %v560 = vunpack.c.l.b16 %v115
    %v561 = vunpack.c.l.b16 %v116
    %v562 = vunpack.c.l.b16 %v117
    %v563 = vunpack.c.l.b16 %v118
    %v564 = vunpack.c.l.b16 %v119
    %v565 = vunpack.c.l.b16 %v120
    %v566 = vunpack.c.l.b16 %v121
    %v567 = vunpack.c.l.b16 %v122
    %v568 = vunpack.c.l.b16 %v123
    %v569 = vunpack.c.l.b16 %v124
    %v570 = vunpack.c.l.b16 %v125
    %v571 = vunpack.c.l.b16 %v126
    %v572 = vunpack.c.l.b16 %v127
    %v573 = vunpack.c.l.b16 %v128
    %v574 = vunpack.c.l.b16 %v129
    %v575 = vunpack.c.l.b16 %v130
    %v576 = vunpack.c.l.b16 %v131
    %v577 = vunpack.c.l.b16 %v132
    %v578 = vunpack.c.l.b16 %v133
    %v579 = vunpack.c.l.b16 %v134
    %v580 = vunpack.c.l.b16 %v135
    %v581 = vunpack.c.l.b16 %v136
    %v582 = vunpack.c.l.b16 %v137
    %v583 = vunpack.c.l.b16 %v138
    %v584 = vunpack.c.l.b16 %v139
    %v585 = vunpack.c.l.b16 %v140
    %v586 = vunpack.c.l.b16 %v141
    %v587 = vunpack.c.l.b16 %v142
    %v588 = vunpack.c.l.b16 %v143
    %v589 = vunpack.c.l.b16 %v144
    %v590 = vunpack.c.l.b16 %v145
    %v591 = vunpack.c.l.b16 %v146
    %v592 = vunpack.c.l.b16 %v147
    %v593 = vunpack.c.l.b16 %v148
    %v594 = vunpack.c.l.b16 %v149
    %v595 = vunpack.c.l.b16 %v150
    %v596 = vunpack.c.l.b16 %v151
    %v597 = vunpack.c.l.b16 %v152
    %v598 = vunpack.c.l.b16 %v153
    %v599 = vunpack.c.l.b16 %v154
    %v600 = vunpack.c.l.b16 %v155
    %v601 = vunpack.c.l.b16 %v156
    %v602 = vunpack.c.l.b16 %v157
    %v603 = vunpack.c.l.b16 %v158
    %v604 = vunpack.c.l.b16 %v159
    %v605 = vunpack.c.l.b16 %v160
    %v606 = vunpack.c.l.b16 %v161
    %v607 = vunpack.c.l.b16 %v162
    %v608 = vunpack.c.l.b16 %v163
    %v609 = vunpack.c.l.b16 %v164
    %v610 = vunpack.c.l.b16 %v165
    %v611 = vunpack.c.l.b16 %v166
    %v612 = vunpack.c.l.b16 %v167
    %v613 = vunpack.c.l.b16 %v168
    %v614 = vunpack.c.l.b16 %v169
    %v615 = vunpack.c.l.b16 %v170
    %v616 = vunpack.c.l.b16 %v171
    %v617 = vunpack.c.l.b16 %v172
    %v618 = vunpack.c.l.b16 %v173
    %v619 = vunpack.c.l.b16 %v174
    %v620 = vpack.c.b16 %v493, %v492
    %v621 = vpack.c.b16 %v495, %v494
    %v622 = vpack.c.b16 %v497, %v496
    %v623 = vpack.c.b16 %v499, %v498
    %v624 = vpack.c.b16 %v501, %v500
    %v625 = vpack.c.b16 %v503, %v502
    %v626 = vpack.c.b16 %v505, %v504
    %v627 = vpack.c.b16 %v507, %v506
    %v628 = vpack.c.b16 %v509, %v508
    %v629 = vpack.c.b16 %v511, %v510
    %v630 = vpack.c.b16 %v513, %v512
    %v631 = vpack.c.b16 %v515, %v514
    %v632 = vpack.c.b16 %v517, %v516
    %v633 = vpack.c.b16 %v519, %v518
    %v634 = vpack.c.b16 %v521, %v520
    %v635 = vpack.c.b16 %v523, %v522
    %v636 = vpack.c.b16 %v525, %v524
    %v637 = vpack.c.b16 %v527, %v526
    %v638 = vpack.c.b16 %v529, %v528
    %v639 = vpack.c.b16 %v531, %v530
    %v640 = vpack.c.b16 %v533, %v532
    %v641 = vpack.c.b16 %v535, %v534
    %v642 = vpack.c.b16 %v537, %v536
    %v643 = vpack.c.b16 %v539, %v538
    %v644 = vpack.c.b16 %v541, %v540
    %v645 = vpack.c.b16 %v543, %v542
    %v646 = vpack.c.b16 %v545, %v544
    %v647 = vpack.c.b16 %v547, %v546
    %v648 = vpack.c.b16 %v549, %v548
    %v649 = vpack.c.b16 %v551, %v550
    %v650 = vpack.c.b16 %v553, %v552
    %v651 = vpack.c.b16 %v555, %v554
    %v652 = vpack.c.b16 %v557, %v556
    %v653 = vpack.c.b16 %v559, %v558
    %v654 = vpack.c.b16 %v561, %v560
    %v655 = vpack.c.b16 %v563, %v562
    %v656 = vpack.c.b16 %v565, %v564
    %v657 = vpack.c.b16 %v567, %v566
    %v658 = vpack.c.b16 %v569, %v568
    %v659 = vpack.c.b16 %v571, %v570
    %v660 = vpack.c.b16 %v573, %v572
    %v661 = vpack.c.b16 %v575, %v574
    %v662 = vpack.c.b16 %v577, %v576
    %v663 = vpack.c.b16 %v579, %v578
    %v664 = vpack.c.b16 %v581, %v580
    %v665 = vpack.c.b16 %v583, %v582
    %v666 = vpack.c.b16 %v585, %v584
    %v667 = vpack.c.b16 %v587, %v586
    %v668 = vpack.c.b16 %v589, %v588
    %v669 = vpack.c.b16 %v591, %v590
    %v670 = vpack.c.b16 %v593, %v592
    %v671 = vpack.c.b16 %v595, %v594
    %v672 = vpack.c.b16 %v597, %v596
    %v673 = vpack.c.b16 %v599, %v598
    %v674 = vpack.c.b16 %v601, %v600
    %v675 = vpack.c.b16 %v603, %v602
    %v676 = vpack.c.b16 %v605, %v604
    %v677 = vpack.c.b16 %v607, %v606
    %v678 = vpack.c.b16 %v609, %v608
    %v679 = vpack.c.b16 %v611, %v610
    %v680 = vpack.c.b16 %v613, %v612
    %v681 = vpack.c.b16 %v615, %v614
    %v682 = vpack.c.b16 %v617, %v616
    %v683 = vpack.c.b16 %v619, %v618
    %748 = vmatprep.subr.bf16.mxu0 0
    %749 = vmatpush1.bf16.msra.mxu0 %v627
    %750 = vmatprep.subr.bf16.mxu0 0
    %751 = vmatpush1.bf16.msra.mxu0 %v626
    %752 = vmatprep.subr.bf16.mxu0 0
    %753 = vmatpush1.bf16.msra.mxu0 %v625
    %754 = vmatprep.subr.bf16.mxu0 0
    %755 = vmatpush1.bf16.msra.mxu0 %v624
    %756 = vmatprep.subr.bf16.mxu0 0
    %757 = vmatpush1.bf16.msra.mxu0 %v623
    %758 = vmatprep.subr.bf16.mxu0 0
    %759 = vmatpush1.bf16.msra.mxu0 %v622
    %760 = vmatprep.subr.bf16.mxu0 0
    %761 = vmatpush1.bf16.msra.mxu0 %v621
    %762 = vmatprep.subr.bf16.mxu0 0
    %763 = vmatpush1.bf16.msra.mxu0 %v620
    %764 = vmatprep.subr.bf16.mxu0 0
    %765 = vmatpush2.bf16.msra.mxu0 %v635
    %766 = vmatprep.subr.bf16.mxu0 0
    %767 = vmatpush2.bf16.msra.mxu0 %v634
    %768 = vmatprep.subr.bf16.mxu0 0
    %769 = vmatpush2.bf16.msra.mxu0 %v633
    %770 = vmatprep.subr.bf16.mxu0 0
    %771 = vmatpush2.bf16.msra.mxu0 %v632
    %772 = vmatprep.subr.bf16.mxu0 0
    %773 = vmatpush2.bf16.msra.mxu0 %v631
    %774 = vmatprep.subr.bf16.mxu0 0
    %775 = vmatpush2.bf16.msra.mxu0 %v630
    %776 = vmatprep.subr.bf16.mxu0 0
    %777 = vmatpush2.bf16.msra.mxu0 %v629
    %778 = vmatprep.subr.bf16.mxu0 0
    %779 = vmatpush2.bf16.msra.mxu0 %v628
    %780 = vmatprep.mubr.bf16.mxu0 %v40
    %781 = vmatmul.mubr.bf16.gmra.mxu0 %v39
    %v782 = vpop.f32.mrf.mxu0
    %v783 = vadd.f32 %v361, %v782
    %v784 = vpop.f32.mrf.mxu0
    %v785 = vpop.f32.mrf.mxu0
    %v786 = vpop.f32.mrf.mxu0
    %787 = vdwg.mxu0
    %788 = vmatprep.subr.bf16.mxu0 0
    %789 = vmatpush1.bf16.msra.mxu0 %v643
    %790 = vmatprep.subr.bf16.mxu0 0
    %791 = vmatpush1.bf16.msra.mxu0 %v642
    %792 = vmatprep.subr.bf16.mxu0 0
    %793 = vmatpush1.bf16.msra.mxu0 %v641
    %794 = vmatprep.subr.bf16.mxu0 0
    %795 = vmatpush1.bf16.msra.mxu0 %v640
    %796 = vmatprep.subr.bf16.mxu0 0
    %797 = vmatpush1.bf16.msra.mxu0 %v639
    %798 = vmatprep.subr.bf16.mxu0 0
    %799 = vmatpush1.bf16.msra.mxu0 %v638
    %800 = vmatprep.subr.bf16.mxu0 0
    %801 = vmatpush1.bf16.msra.mxu0 %v637
    %802 = vmatprep.subr.bf16.mxu0 0
    %803 = vmatpush1.bf16.msra.mxu0 %v636
    %804 = vmatprep.subr.bf16.mxu0 0
    %805 = vmatpush2.bf16.msra.mxu0 %v651
    %806 = vmatprep.subr.bf16.mxu0 0
    %807 = vmatpush2.bf16.msra.mxu0 %v650
    %808 = vmatprep.subr.bf16.mxu0 0
    %809 = vmatpush2.bf16.msra.mxu0 %v649
    %810 = vmatprep.subr.bf16.mxu0 0
    %811 = vmatpush2.bf16.msra.mxu0 %v648
    %812 = vmatprep.subr.bf16.mxu0 0
    %813 = vmatpush2.bf16.msra.mxu0 %v647
    %814 = vmatprep.subr.bf16.mxu0 0
    %815 = vmatpush2.bf16.msra.mxu0 %v646
    %816 = vmatprep.subr.bf16.mxu0 0
    %817 = vmatpush2.bf16.msra.mxu0 %v645
    %818 = vmatprep.subr.bf16.mxu0 0
    %819 = vmatpush2.bf16.msra.mxu0 %v644
    %820 = vmatprep.mubr.bf16.mxu0 %v42
    %821 = vmatmul.mubr.bf16.gmra.mxu0 %v41
    %v822 = vpop.f32.mrf.mxu0
    %v823 = vadd.f32 %v783, %v822
    %v824 = vpop.f32.mrf.mxu0
    %v825 = vpop.f32.mrf.mxu0
    %v826 = vpop.f32.mrf.mxu0
    %827 = vdwg.mxu0
    %828 = vmatprep.subr.bf16.mxu0 0
    %829 = vmatpush1.bf16.msra.mxu0 %v659
    %830 = vmatprep.subr.bf16.mxu0 0
    %831 = vmatpush1.bf16.msra.mxu0 %v658
    %832 = vmatprep.subr.bf16.mxu0 0
    %833 = vmatpush1.bf16.msra.mxu0 %v657
    %834 = vmatprep.subr.bf16.mxu0 0
    %835 = vmatpush1.bf16.msra.mxu0 %v656
    %836 = vmatprep.subr.bf16.mxu0 0
    %837 = vmatpush1.bf16.msra.mxu0 %v655
    %838 = vmatprep.subr.bf16.mxu0 0
    %839 = vmatpush1.bf16.msra.mxu0 %v654
    %840 = vmatprep.subr.bf16.mxu0 0
    %841 = vmatpush1.bf16.msra.mxu0 %v653
    %842 = vmatprep.subr.bf16.mxu0 0
    %843 = vmatpush1.bf16.msra.mxu0 %v652
    %844 = vmatprep.subr.bf16.mxu0 0
    %845 = vmatpush2.bf16.msra.mxu0 %v667
    %846 = vmatprep.subr.bf16.mxu0 0
    %847 = vmatpush2.bf16.msra.mxu0 %v666
    %848 = vmatprep.subr.bf16.mxu0 0
    %849 = vmatpush2.bf16.msra.mxu0 %v665
    %850 = vmatprep.subr.bf16.mxu0 0
    %851 = vmatpush2.bf16.msra.mxu0 %v664
    %852 = vmatprep.subr.bf16.mxu0 0
    %853 = vmatpush2.bf16.msra.mxu0 %v663
    %854 = vmatprep.subr.bf16.mxu0 0
    %855 = vmatpush2.bf16.msra.mxu0 %v662
    %856 = vmatprep.subr.bf16.mxu0 0
    %857 = vmatpush2.bf16.msra.mxu0 %v661
    %858 = vmatprep.subr.bf16.mxu0 0
    %859 = vmatpush2.bf16.msra.mxu0 %v660
    %860 = vmatprep.mubr.bf16.mxu0 %v44
    %861 = vmatmul.mubr.bf16.gmra.mxu0 %v43
    %v862 = vpop.f32.mrf.mxu0
    %v863 = vadd.f32 %v823, %v862
    %v864 = vpop.f32.mrf.mxu0
    %v865 = vpop.f32.mrf.mxu0
    %v866 = vpop.f32.mrf.mxu0
    %867 = vdwg.mxu0
    %868 = vmatprep.subr.bf16.mxu0 0
    %869 = vmatpush1.bf16.msra.mxu0 %v675
    %870 = vmatprep.subr.bf16.mxu0 0
    %871 = vmatpush1.bf16.msra.mxu0 %v674
    %872 = vmatprep.subr.bf16.mxu0 0
    %873 = vmatpush1.bf16.msra.mxu0 %v673
    %874 = vmatprep.subr.bf16.mxu0 0
    %875 = vmatpush1.bf16.msra.mxu0 %v672
    %876 = vmatprep.subr.bf16.mxu0 0
    %877 = vmatpush1.bf16.msra.mxu0 %v671
    %878 = vmatprep.subr.bf16.mxu0 0
    %879 = vmatpush1.bf16.msra.mxu0 %v670
    %880 = vmatprep.subr.bf16.mxu0 0
    %881 = vmatpush1.bf16.msra.mxu0 %v669
    %882 = vmatprep.subr.bf16.mxu0 0
    %883 = vmatpush1.bf16.msra.mxu0 %v668
    %884 = vmatprep.subr.bf16.mxu0 0
    %885 = vmatpush2.bf16.msra.mxu0 %v683
    %886 = vmatprep.subr.bf16.mxu0 0
    %887 = vmatpush2.bf16.msra.mxu0 %v682
    %888 = vmatprep.subr.bf16.mxu0 0
    %889 = vmatpush2.bf16.msra.mxu0 %v681
    %890 = vmatprep.subr.bf16.mxu0 0
    %891 = vmatpush2.bf16.msra.mxu0 %v680
    %892 = vmatprep.subr.bf16.mxu0 0
    %893 = vmatpush2.bf16.msra.mxu0 %v679
    %894 = vmatprep.subr.bf16.mxu0 0
    %895 = vmatpush2.bf16.msra.mxu0 %v678
    %896 = vmatprep.subr.bf16.mxu0 0
    %897 = vmatpush2.bf16.msra.mxu0 %v677
    %898 = vmatprep.subr.bf16.mxu0 0
    %899 = vmatpush2.bf16.msra.mxu0 %v676
    %900 = vmatprep.mubr.bf16.mxu0 %v46
    %901 = vmatmul.mubr.bf16.gmra.mxu0 %v45
    %v902 = vpop.f32.mrf.mxu0
    %v903 = vadd.f32 %v863, %v902
    %v904 = vpop.f32.mrf.mxu0
    %v905 = vpop.f32.mrf.mxu0
    %v906 = vpop.f32.mrf.mxu0
    %907 = vdwg.mxu0
    %v908 = vld [vmem:[%s3 + $0x12c] sm:$0x1]
    %v909 = vlaneseq
    %v910 = vshrl.u32 %v909, 7
    %v911 = vsub.s32 0, %v910
    %v912 = vrot.slane %v908, %v911
    %v913 = vadd.f32 %v903, %v912
    %v914 = vld [vmem:[%s4] sm:$0xff]
    %v915 = vld [vmem:[%s4 + $0x8] sm:$0xff]
    %v916 = vld [vmem:[%s4 + $0x10] sm:$0xff]
    %v917 = vld [vmem:[%s4 + $0x18] sm:$0xff]
    %v918 = vld [vmem:[%s4 + $0x80] sm:$0x1]
    %v919 = vlaneseq
    %v920 = vshrl.u32 %v919, 7
    %v921 = vsub.s32 0, %v920
    %v922 = vrot.slane %v918, %v921
    %vm923 = vcmask 261120
    %v925 = vsel %vm923, %v913, 0
    %927 = vmatprep.subr.mxu0 0.0
    %928 = vmatpush1.msra.mxu0 0.0
    %929 = vmatprep.subr.mxu0 0.0
    %930 = vmatpush1.msra.mxu0 0.0
    %931 = vmatprep.subr.mxu0 0.0
    %932 = vmatpush1.msra.mxu0 0.0
    %933 = vmatprep.subr.mxu0 0.0
    %934 = vmatpush1.msra.mxu0 0.0
    %935 = vmatprep.subr.mxu0 0.0
    %936 = vmatpush1.msra.mxu0 0.0
    %937 = vmatprep.subr.mxu0 0.0
    %938 = vmatpush1.msra.mxu0 0.0
    %939 = vmatprep.subr.mxu0 0.0
    %940 = vmatpush1.msra.mxu0 0.0
    %941 = vmatprep.subr.mxu0 0.0
    %942 = vmatpush1.msra.mxu0 0.0
    %943 = vmatprep.subr.mxu0 0.0
    %944 = vmatpush1.msra.mxu0 0.0
    %945 = vmatprep.subr.mxu0 0.0
    %946 = vmatpush1.msra.mxu0 0.0
    %947 = vmatprep.subr.mxu0 0.0
    %948 = vmatpush1.msra.mxu0 0.0
    %949 = vmatprep.subr.mxu0 0.0
    %950 = vmatpush1.msra.mxu0 0.0
    %951 = vmatprep.subr.mxu0 0.0
    %952 = vmatpush1.msra.mxu0 %v917
    %953 = vmatprep.subr.mxu0 0.0
    %954 = vmatpush1.msra.mxu0 %v916
    %955 = vmatprep.subr.mxu0 0.0
    %956 = vmatpush1.msra.mxu0 %v915
    %957 = vmatprep.subr.mxu0 0.0
    %958 = vmatpush1.msra.mxu0 %v914
    %959 = vmatprep.subr.mxu0 0.0
    %960 = vmatpush2.msra.mxu0 0.0
    %961 = vmatprep.subr.mxu0 0.0
    %962 = vmatpush2.msra.mxu0 0.0
    %963 = vmatprep.subr.mxu0 0.0
    %964 = vmatpush2.msra.mxu0 0.0
    %965 = vmatprep.subr.mxu0 0.0
    %966 = vmatpush2.msra.mxu0 0.0
    %967 = vmatprep.subr.mxu0 0.0
    %968 = vmatpush2.msra.mxu0 0.0
    %969 = vmatprep.subr.mxu0 0.0
    %970 = vmatpush2.msra.mxu0 0.0
    %971 = vmatprep.subr.mxu0 0.0
    %972 = vmatpush2.msra.mxu0 0.0
    %973 = vmatprep.subr.mxu0 0.0
    %974 = vmatpush2.msra.mxu0 0.0
    %975 = vmatprep.subr.mxu0 0.0
    %976 = vmatpush2.msra.mxu0 0.0
    %977 = vmatprep.subr.mxu0 0.0
    %978 = vmatpush2.msra.mxu0 0.0
    %979 = vmatprep.subr.mxu0 0.0
    %980 = vmatpush2.msra.mxu0 0.0
    %981 = vmatprep.subr.mxu0 0.0
    %982 = vmatpush2.msra.mxu0 0.0
    %983 = vmatprep.subr.mxu0 0.0
    %984 = vmatpush2.msra.mxu0 0.0
    %985 = vmatprep.subr.mxu0 0.0
    %986 = vmatpush2.msra.mxu0 0.0
    %987 = vmatprep.subr.mxu0 0.0
    %988 = vmatpush2.msra.mxu0 0.0
    %989 = vmatprep.subr.mxu0 0.0
    %990 = vmatpush2.msra.mxu0 0.0
    %991 = vmatprep.mubr.f32.mxu0 0.0
    %992 = vmatmul.mubr.f32.gmra.mxu0 %v925
    %v993 = vpop.f32.mrf.mxu0
    %v994 = vadd.f32 %v922, %v993
    %v995 = vpop.f32.mrf.mxu0
    %996 = vdwg.mxu0
    %v997 = vld [vmem:[%s4 + $0x20] sm:$0xff]
    %v998 = vld [vmem:[%s4 + $0x28] sm:$0xff]
    %v999 = vld [vmem:[%s4 + $0x30] sm:$0xff]
    %v1000 = vld [vmem:[%s4 + $0x38] sm:$0xff]
    %v1001 = vld [vmem:[%s4 + $0x40] sm:$0xff]
    %v1002 = vld [vmem:[%s4 + $0x48] sm:$0xff]
    %v1003 = vld [vmem:[%s4 + $0x50] sm:$0xff]
    %v1004 = vld [vmem:[%s4 + $0x58] sm:$0xff]
    %v1005 = vld [vmem:[%s4 + $0x81] sm:$0x1]
    %v1006 = vlaneseq
    %v1007 = vshrl.u32 %v1006, 7
    %v1008 = vsub.s32 0, %v1007
    %v1009 = vrot.slane %v1005, %v1008
    %1011 = vrot.lane.b32.xlu0 %v994, 96
    %v1012 = vpop.permute.xlu0 %1011
    %vm1013 = vcmask 523264
    %v1014 = vsel %vm1013, %v1012, 0
    %1016 = vmatprep.subr.mxu0 0.0
    %1017 = vmatpush1.msra.mxu0 0.0
    %1018 = vmatprep.subr.mxu0 0.0
    %1019 = vmatpush1.msra.mxu0 0.0
    %1020 = vmatprep.subr.mxu0 0.0
    %1021 = vmatpush1.msra.mxu0 0.0
    %1022 = vmatprep.subr.mxu0 0.0
    %1023 = vmatpush1.msra.mxu0 0.0
    %1024 = vmatprep.subr.mxu0 0.0
    %1025 = vmatpush1.msra.mxu0 0.0
    %1026 = vmatprep.subr.mxu0 0.0
    %1027 = vmatpush1.msra.mxu0 0.0
    %1028 = vmatprep.subr.mxu0 0.0
    %1029 = vmatpush1.msra.mxu0 0.0
    %1030 = vmatprep.subr.mxu0 0.0
    %1031 = vmatpush1.msra.mxu0 0.0
    %1032 = vmatprep.subr.mxu0 0.0
    %1033 = vmatpush1.msra.mxu0 %v1004
    %1034 = vmatprep.subr.mxu0 0.0
    %1035 = vmatpush1.msra.mxu0 %v1003
    %1036 = vmatprep.subr.mxu0 0.0
    %1037 = vmatpush1.msra.mxu0 %v1002
    %1038 = vmatprep.subr.mxu0 0.0
    %1039 = vmatpush1.msra.mxu0 %v1001
    %1040 = vmatprep.subr.mxu0 0.0
    %1041 = vmatpush1.msra.mxu0 %v1000
    %1042 = vmatprep.subr.mxu0 0.0
    %1043 = vmatpush1.msra.mxu0 %v999
    %1044 = vmatprep.subr.mxu0 0.0
    %1045 = vmatpush1.msra.mxu0 %v998
    %1046 = vmatprep.subr.mxu0 0.0
    %1047 = vmatpush1.msra.mxu0 %v997
    %1048 = vmatprep.subr.mxu0 0.0
    %1049 = vmatpush2.msra.mxu0 0.0
    %1050 = vmatprep.subr.mxu0 0.0
    %1051 = vmatpush2.msra.mxu0 0.0
    %1052 = vmatprep.subr.mxu0 0.0
    %1053 = vmatpush2.msra.mxu0 0.0
    %1054 = vmatprep.subr.mxu0 0.0
    %1055 = vmatpush2.msra.mxu0 0.0
    %1056 = vmatprep.subr.mxu0 0.0
    %1057 = vmatpush2.msra.mxu0 0.0
    %1058 = vmatprep.subr.mxu0 0.0
    %1059 = vmatpush2.msra.mxu0 0.0
    %1060 = vmatprep.subr.mxu0 0.0
    %1061 = vmatpush2.msra.mxu0 0.0
    %1062 = vmatprep.subr.mxu0 0.0
    %1063 = vmatpush2.msra.mxu0 0.0
    %1064 = vmatprep.subr.mxu0 0.0
    %1065 = vmatpush2.msra.mxu0 0.0
    %1066 = vmatprep.subr.mxu0 0.0
    %1067 = vmatpush2.msra.mxu0 0.0
    %1068 = vmatprep.subr.mxu0 0.0
    %1069 = vmatpush2.msra.mxu0 0.0
    %1070 = vmatprep.subr.mxu0 0.0
    %1071 = vmatpush2.msra.mxu0 0.0
    %1072 = vmatprep.subr.mxu0 0.0
    %1073 = vmatpush2.msra.mxu0 0.0
    %1074 = vmatprep.subr.mxu0 0.0
    %1075 = vmatpush2.msra.mxu0 0.0
    %1076 = vmatprep.subr.mxu0 0.0
    %1077 = vmatpush2.msra.mxu0 0.0
    %1078 = vmatprep.subr.mxu0 0.0
    %1079 = vmatpush2.msra.mxu0 0.0
    %1080 = vmatprep.mubr.f32.mxu0 0.0
    %1081 = vmatmul.mubr.f32.gmra.mxu0 %v1014
    %v1082 = vpop.f32.mrf.mxu0
    %v1083 = vadd.f32 %v1009, %v1082
    %v1084 = vpop.f32.mrf.mxu0
    %1085 = vdwg.mxu0
    %1087 = vrot.lane.b32.xlu0 %v1083, 96
    %v1088 = vpop.permute.xlu0 %1087
    %v1090 = vmul.f32 %v1083, %v1088
    %v1091 = vld [vmem:[%s4 + $0x60] sm:$0xff]
    %v1092 = vld [vmem:[%s4 + $0x68] sm:$0xff]
    %v1093 = vld [vmem:[%s4 + $0x70] sm:$0xff]
    %v1094 = vld [vmem:[%s4 + $0x78] sm:$0xff]
    %v1095 = vld [vmem:[%s4 + $0x82] sm:$0x1]
    %v1096 = vlaneseq
    %v1097 = vshrl.u32 %v1096, 7
    %v1098 = vsub.s32 0, %v1097
    %v1099 = vrot.slane %v1095, %v1098
    %v1101 = vsel %vm923, %v1090, 0
    %1103 = vmatprep.subr.mxu0 0.0
    %1104 = vmatpush1.msra.mxu0 0.0
    %1105 = vmatprep.subr.mxu0 0.0
    %1106 = vmatpush1.msra.mxu0 0.0
    %1107 = vmatprep.subr.mxu0 0.0
    %1108 = vmatpush1.msra.mxu0 0.0
    %1109 = vmatprep.subr.mxu0 0.0
    %1110 = vmatpush1.msra.mxu0 0.0
    %1111 = vmatprep.subr.mxu0 0.0
    %1112 = vmatpush1.msra.mxu0 0.0
    %1113 = vmatprep.subr.mxu0 0.0
    %1114 = vmatpush1.msra.mxu0 0.0
    %1115 = vmatprep.subr.mxu0 0.0
    %1116 = vmatpush1.msra.mxu0 0.0
    %1117 = vmatprep.subr.mxu0 0.0
    %1118 = vmatpush1.msra.mxu0 0.0
    %1119 = vmatprep.subr.mxu0 0.0
    %1120 = vmatpush1.msra.mxu0 0.0
    %1121 = vmatprep.subr.mxu0 0.0
    %1122 = vmatpush1.msra.mxu0 0.0
    %1123 = vmatprep.subr.mxu0 0.0
    %1124 = vmatpush1.msra.mxu0 0.0
    %1125 = vmatprep.subr.mxu0 0.0
    %1126 = vmatpush1.msra.mxu0 0.0
    %1127 = vmatprep.subr.mxu0 0.0
    %1128 = vmatpush1.msra.mxu0 %v1094
    %1129 = vmatprep.subr.mxu0 0.0
    %1130 = vmatpush1.msra.mxu0 %v1093
    %1131 = vmatprep.subr.mxu0 0.0
    %1132 = vmatpush1.msra.mxu0 %v1092
    %1133 = vmatprep.subr.mxu0 0.0
    %1134 = vmatpush1.msra.mxu0 %v1091
    %1135 = vmatprep.subr.mxu0 0.0
    %1136 = vmatpush2.msra.mxu0 0.0
    %1137 = vmatprep.subr.mxu0 0.0
    %1138 = vmatpush2.msra.mxu0 0.0
    %1139 = vmatprep.subr.mxu0 0.0
    %1140 = vmatpush2.msra.mxu0 0.0
    %1141 = vmatprep.subr.mxu0 0.0
    %1142 = vmatpush2.msra.mxu0 0.0
    %1143 = vmatprep.subr.mxu0 0.0
    %1144 = vmatpush2.msra.mxu0 0.0
    %1145 = vmatprep.subr.mxu0 0.0
    %1146 = vmatpush2.msra.mxu0 0.0
    %1147 = vmatprep.subr.mxu0 0.0
    %1148 = vmatpush2.msra.mxu0 0.0
    %1149 = vmatprep.subr.mxu0 0.0
    %1150 = vmatpush2.msra.mxu0 0.0
    %1151 = vmatprep.subr.mxu0 0.0
    %1152 = vmatpush2.msra.mxu0 0.0
    %1153 = vmatprep.subr.mxu0 0.0
    %1154 = vmatpush2.msra.mxu0 0.0
    %1155 = vmatprep.subr.mxu0 0.0
    %1156 = vmatpush2.msra.mxu0 0.0
    %1157 = vmatprep.subr.mxu0 0.0
    %1158 = vmatpush2.msra.mxu0 0.0
    %1159 = vmatprep.subr.mxu0 0.0
    %1160 = vmatpush2.msra.mxu0 0.0
    %1161 = vmatprep.subr.mxu0 0.0
    %1162 = vmatpush2.msra.mxu0 0.0
    %1163 = vmatprep.subr.mxu0 0.0
    %1164 = vmatpush2.msra.mxu0 0.0
    %1165 = vmatprep.subr.mxu0 0.0
    %1166 = vmatpush2.msra.mxu0 0.0
    %1167 = vmatprep.mubr.f32.mxu0 0.0
    %1168 = vmatmul.mubr.f32.gmra.mxu0 %v1101
    %v1169 = vpop.f32.mrf.mxu0
    %v1170 = vadd.f32 %v1099, %v1169
    %v1171 = vpop.f32.mrf.mxu0
    %1172 = vdwg.mxu0
    %v1173 = vsub.f32 0.0, %v1170
    %v1174 = vmul.f32 %v1173, 1.442695
    %v1175 = vpow.pop %v1174
    %v1176 = vadd.f32 %v1175, 1.0
    %v1177 = vrcp.pop %v1176
    %1179 = vrot.lane.b32.xlu0 %v1177, 32
    %v1180 = vpop.permute.xlu0 %1179
    %v1182 = vmul.f32 %v994, %v1180
    %1183 = vrot.lane.b32.xlu0 %v1177, 64
    %v1184 = vpop.permute.xlu0 %1183
    %v1186 = vmul.f32 %v994, %v1184
    %1188 = vrot.lane.b32.xlu0 %v1182, 96
    %v1189 = vpop.permute.xlu0 %1188
    %1191 = vrot.lane.b32.xlu0 %v1186, 64
    %v1192 = vpop.permute.xlu0 %1191
    %v1193 = vsel %vm923, %v1189, 0
    %v1195 = vsel %vm923, %v1192, 0
    %1197 = vmatprep.subr.mxu0 0.0
    %1198 = vmatpush1.xpose.msra.mxu0 0.0
    %1199 = vmatprep.subr.mxu0 0.0
    %1200 = vmatpush1.xpose.msra.mxu0 0.0
    %1201 = vmatprep.subr.mxu0 0.0
    %1202 = vmatpush1.xpose.msra.mxu0 0.0
    %1203 = vmatprep.subr.mxu0 0.0
    %1204 = vmatpush1.xpose.msra.mxu0 0.0
    %1205 = vmatprep.subr.mxu0 0.0
    %1206 = vmatpush1.xpose.msra.mxu0 0.0
    %1207 = vmatprep.subr.mxu0 0.0
    %1208 = vmatpush1.xpose.msra.mxu0 0.0
    %1209 = vmatprep.subr.mxu0 0.0
    %1210 = vmatpush1.xpose.msra.mxu0 0.0
    %1211 = vmatprep.subr.mxu0 0.0
    %1212 = vmatpush1.xpose.msra.mxu0 0.0
    %1213 = vmatprep.subr.mxu0 0.0
    %1214 = vmatpush1.xpose.msra.mxu0 0.0
    %1215 = vmatprep.subr.mxu0 0.0
    %1216 = vmatpush1.xpose.msra.mxu0 0.0
    %1217 = vmatprep.subr.mxu0 0.0
    %1218 = vmatpush1.xpose.msra.mxu0 0.0
    %1219 = vmatprep.subr.mxu0 0.0
    %1220 = vmatpush1.xpose.msra.mxu0 0.0
    %1221 = vmatprep.subr.mxu0 0.0
    %1222 = vmatpush1.xpose.msra.mxu0 0.0
    %1223 = vmatprep.subr.mxu0 0.0
    %1224 = vmatpush1.xpose.msra.mxu0 0.0
    %1225 = vmatprep.subr.mxu0 0.0
    %1226 = vmatpush1.xpose.msra.mxu0 0.0
    %1227 = vmatprep.subr.mxu0 0.0
    %1228 = vmatpush1.xpose.msra.mxu0 %v1195
    %1229 = vmatprep.subr.mxu0 0.0
    %1230 = vmatpush2.xpose.msra.mxu0 0.0
    %1231 = vmatprep.subr.mxu0 0.0
    %1232 = vmatpush2.xpose.msra.mxu0 0.0
    %1233 = vmatprep.subr.mxu0 0.0
    %1234 = vmatpush2.xpose.msra.mxu0 0.0
    %1235 = vmatprep.subr.mxu0 0.0
    %1236 = vmatpush2.xpose.msra.mxu0 0.0
    %1237 = vmatprep.subr.mxu0 0.0
    %1238 = vmatpush2.xpose.msra.mxu0 0.0
    %1239 = vmatprep.subr.mxu0 0.0
    %1240 = vmatpush2.xpose.msra.mxu0 0.0
    %1241 = vmatprep.subr.mxu0 0.0
    %1242 = vmatpush2.xpose.msra.mxu0 0.0
    %1243 = vmatprep.subr.mxu0 0.0
    %1244 = vmatpush2.xpose.msra.mxu0 0.0
    %1245 = vmatprep.subr.mxu0 0.0
    %1246 = vmatpush2.xpose.msra.mxu0 0.0
    %1247 = vmatprep.subr.mxu0 0.0
    %1248 = vmatpush2.xpose.msra.mxu0 0.0
    %1249 = vmatprep.subr.mxu0 0.0
    %1250 = vmatpush2.xpose.msra.mxu0 0.0
    %1251 = vmatprep.subr.mxu0 0.0
    %1252 = vmatpush2.xpose.msra.mxu0 0.0
    %1253 = vmatprep.subr.mxu0 0.0
    %1254 = vmatpush2.xpose.msra.mxu0 0.0
    %1255 = vmatprep.subr.mxu0 0.0
    %1256 = vmatpush2.xpose.msra.mxu0 0.0
    %1257 = vmatprep.subr.mxu0 0.0
    %1258 = vmatpush2.xpose.msra.mxu0 0.0
    %1259 = vmatprep.subr.mxu0 0.0
    %1260 = vmatpush2.xpose.msra.mxu0 0.0
    %1261 = vmatprep.mubr.f32.mxu0 0.0
    %1262 = vmatmul.mubr.f32.gmra.mxu0 %v1193
    %v1263 = vpop.f32.mrf.mxu0
    %v1264 = vadd.f32 0.0, %v1263
    %v1265 = vpop.f32.mrf.mxu0
    %1266 = vdwg.mxu0
    %v1267 = vmul.f32 %v1264, 0.17677669
    %vm1268 = vcmask 64512
    %v1269 = vsel %vm1268, %v1267, -inf
    %1270 = vmax.xlane.f32.xlu0 %v1269
    %v1271 = vpop.xlane.xlu0 %1270
    %v1272 = vrot.slane %v1271, 4
    %v1273 = vmax.f32 %v1271, %v1272
    %v1274 = vrot.slane %v1273, 2
    %v1275 = vmax.f32 %v1273, %v1274
    %v1276 = vrot.slane %v1275, 1
    %v1277 = vmax.f32 %v1275, %v1276
    %v1278 = vsub.f32 %v1267, %v1277
    %v1279 = vmul.f32 %v1278, 1.442695
    %v1280 = vpow.pop %v1279
    %v1281 = vsel %vm1268, %v1280, 0.0
    %1282 = vadd.xlane.f32.xlu0 %v1281
    %v1283 = vpop.xlane.xlu0 %1282
    %v1284 = vrot.slane %v1283, 4
    %v1285 = vadd.f32 %v1283, %v1284
    %v1286 = vrot.slane %v1285, 2
    %v1287 = vadd.f32 %v1285, %v1286
    %v1288 = vrot.slane %v1287, 1
    %v1289 = vadd.f32 %v1287, %v1288
    %v1291 = vsel %vm1268, %v1280, 0
    %1293 = vmatprep.subr.mxu0 0.0
    %1294 = vmatpush1.msra.mxu0 0.0
    %1295 = vmatprep.subr.mxu0 0.0
    %1296 = vmatpush1.msra.mxu0 0.0
    %1297 = vmatprep.subr.mxu0 0.0
    %1298 = vmatpush1.msra.mxu0 0.0
    %1299 = vmatprep.subr.mxu0 0.0
    %1300 = vmatpush1.msra.mxu0 0.0
    %1301 = vmatprep.subr.mxu0 0.0
    %1302 = vmatpush1.msra.mxu0 0.0
    %1303 = vmatprep.subr.mxu0 0.0
    %1304 = vmatpush1.msra.mxu0 0.0
    %1305 = vmatprep.subr.mxu0 0.0
    %1306 = vmatpush1.msra.mxu0 0.0
    %1307 = vmatprep.subr.mxu0 0.0
    %1308 = vmatpush1.msra.mxu0 0.0
    %1309 = vmatprep.subr.mxu0 0.0
    %1310 = vmatpush1.msra.mxu0 0.0
    %1311 = vmatprep.subr.mxu0 0.0
    %1312 = vmatpush1.msra.mxu0 0.0
    %1313 = vmatprep.subr.mxu0 0.0
    %1314 = vmatpush1.msra.mxu0 0.0
    %1315 = vmatprep.subr.mxu0 0.0
    %1316 = vmatpush1.msra.mxu0 0.0
    %1317 = vmatprep.subr.mxu0 0.0
    %1318 = vmatpush1.msra.mxu0 0.0
    %1319 = vmatprep.subr.mxu0 0.0
    %1320 = vmatpush1.msra.mxu0 0.0
    %1321 = vmatprep.subr.mxu0 0.0
    %1322 = vmatpush1.msra.mxu0 0.0
    %1323 = vmatprep.subr.mxu0 0.0
    %1324 = vmatpush1.msra.mxu0 %v994
    %1325 = vmatprep.subr.mxu0 0.0
    %1326 = vmatpush2.msra.mxu0 0.0
    %1327 = vmatprep.subr.mxu0 0.0
    %1328 = vmatpush2.msra.mxu0 0.0
    %1329 = vmatprep.subr.mxu0 0.0
    %1330 = vmatpush2.msra.mxu0 0.0
    %1331 = vmatprep.subr.mxu0 0.0
    %1332 = vmatpush2.msra.mxu0 0.0
    %1333 = vmatprep.subr.mxu0 0.0
    %1334 = vmatpush2.msra.mxu0 0.0
    %1335 = vmatprep.subr.mxu0 0.0
    %1336 = vmatpush2.msra.mxu0 0.0
    %1337 = vmatprep.subr.mxu0 0.0
    %1338 = vmatpush2.msra.mxu0 0.0
    %1339 = vmatprep.subr.mxu0 0.0
    %1340 = vmatpush2.msra.mxu0 0.0
    %1341 = vmatprep.subr.mxu0 0.0
    %1342 = vmatpush2.msra.mxu0 0.0
    %1343 = vmatprep.subr.mxu0 0.0
    %1344 = vmatpush2.msra.mxu0 0.0
    %1345 = vmatprep.subr.mxu0 0.0
    %1346 = vmatpush2.msra.mxu0 0.0
    %1347 = vmatprep.subr.mxu0 0.0
    %1348 = vmatpush2.msra.mxu0 0.0
    %1349 = vmatprep.subr.mxu0 0.0
    %1350 = vmatpush2.msra.mxu0 0.0
    %1351 = vmatprep.subr.mxu0 0.0
    %1352 = vmatpush2.msra.mxu0 0.0
    %1353 = vmatprep.subr.mxu0 0.0
    %1354 = vmatpush2.msra.mxu0 0.0
    %1355 = vmatprep.subr.mxu0 0.0
    %1356 = vmatpush2.msra.mxu0 0.0
    %1357 = vmatprep.mubr.f32.mxu0 0.0
    %1358 = vmatmul.mubr.f32.gmra.mxu0 %v1291
    %v1359 = vpop.f32.mrf.mxu0
    %v1360 = vadd.f32 0.0, %v1359
    %v1361 = vpop.f32.mrf.mxu0
    %1362 = vdwg.mxu0
    %v1363 = vrcp.pop %v1289
    %v1364 = vmul.f32 %v1360, %v1363
    %v1365 = vld [vmem:[%s5] sm:$0xff]
    %v1366 = vld [vmem:[%s5 + $0x8] sm:$0xff]
    %v1367 = vld [vmem:[%s5 + $0x10] sm:$0xff]
    %v1368 = vld [vmem:[%s5 + $0x18] sm:$0xff]
    %v1369 = vld [vmem:[%s5 + $0x20] sm:$0xff]
    %v1370 = vld [vmem:[%s5 + $0x28] sm:$0xff]
    %v1371 = vld [vmem:[%s5 + $0x30] sm:$0xff]
    %v1372 = vld [vmem:[%s5 + $0x38] sm:$0xff]
    %v1374 = vsel %vm923, %v1364, 0
    %1376 = vmatprep.subr.mxu0 0.0
    %1377 = vmatpush1.msra.mxu0 0.0
    %1378 = vmatprep.subr.mxu0 0.0
    %1379 = vmatpush1.msra.mxu0 0.0
    %1380 = vmatprep.subr.mxu0 0.0
    %1381 = vmatpush1.msra.mxu0 0.0
    %1382 = vmatprep.subr.mxu0 0.0
    %1383 = vmatpush1.msra.mxu0 0.0
    %1384 = vmatprep.subr.mxu0 0.0
    %1385 = vmatpush1.msra.mxu0 0.0
    %1386 = vmatprep.subr.mxu0 0.0
    %1387 = vmatpush1.msra.mxu0 0.0
    %1388 = vmatprep.subr.mxu0 0.0
    %1389 = vmatpush1.msra.mxu0 0.0
    %1390 = vmatprep.subr.mxu0 0.0
    %1391 = vmatpush1.msra.mxu0 0.0
    %1392 = vmatprep.subr.mxu0 0.0
    %1393 = vmatpush1.msra.mxu0 0.0
    %1394 = vmatprep.subr.mxu0 0.0
    %1395 = vmatpush1.msra.mxu0 0.0
    %1396 = vmatprep.subr.mxu0 0.0
    %1397 = vmatpush1.msra.mxu0 0.0
    %1398 = vmatprep.subr.mxu0 0.0
    %1399 = vmatpush1.msra.mxu0 0.0
    %1400 = vmatprep.subr.mxu0 0.0
    %1401 = vmatpush1.msra.mxu0 %v1372
    %1402 = vmatprep.subr.mxu0 0.0
    %1403 = vmatpush1.msra.mxu0 %v1371
    %1404 = vmatprep.subr.mxu0 0.0
    %1405 = vmatpush1.msra.mxu0 %v1370
    %1406 = vmatprep.subr.mxu0 0.0
    %1407 = vmatpush1.msra.mxu0 %v1369
    %1408 = vmatprep.subr.mxu0 0.0
    %1409 = vmatpush2.msra.mxu0 0.0
    %1410 = vmatprep.subr.mxu0 0.0
    %1411 = vmatpush2.msra.mxu0 0.0
    %1412 = vmatprep.subr.mxu0 0.0
    %1413 = vmatpush2.msra.mxu0 0.0
    %1414 = vmatprep.subr.mxu0 0.0
    %1415 = vmatpush2.msra.mxu0 0.0
    %1416 = vmatprep.subr.mxu0 0.0
    %1417 = vmatpush2.msra.mxu0 0.0
    %1418 = vmatprep.subr.mxu0 0.0
    %1419 = vmatpush2.msra.mxu0 0.0
    %1420 = vmatprep.subr.mxu0 0.0
    %1421 = vmatpush2.msra.mxu0 0.0
    %1422 = vmatprep.subr.mxu0 0.0
    %1423 = vmatpush2.msra.mxu0 0.0
    %1424 = vmatprep.subr.mxu0 0.0
    %1425 = vmatpush2.msra.mxu0 0.0
    %1426 = vmatprep.subr.mxu0 0.0
    %1427 = vmatpush2.msra.mxu0 0.0
    %1428 = vmatprep.subr.mxu0 0.0
    %1429 = vmatpush2.msra.mxu0 0.0
    %1430 = vmatprep.subr.mxu0 0.0
    %1431 = vmatpush2.msra.mxu0 0.0
    %1432 = vmatprep.subr.mxu0 0.0
    %1433 = vmatpush2.msra.mxu0 0.0
    %1434 = vmatprep.subr.mxu0 0.0
    %1435 = vmatpush2.msra.mxu0 0.0
    %1436 = vmatprep.subr.mxu0 0.0
    %1437 = vmatpush2.msra.mxu0 0.0
    %1438 = vmatprep.subr.mxu0 0.0
    %1439 = vmatpush2.msra.mxu0 0.0
    %1440 = vmatprep.mubr.f32.mxu0 0.0
    %1441 = vmatmul.mubr.f32.gmra.mxu0 %v1374
    %v1442 = vpop.f32.mrf.mxu0
    %v1443 = vadd.f32 0.0, %v1442
    %v1444 = vpop.f32.mrf.mxu0
    %1445 = vdwg.mxu0
    %1446 = vmatprep.subr.mxu0 0.0
    %1447 = vmatpush1.msra.mxu0 0.0
    %1448 = vmatprep.subr.mxu0 0.0
    %1449 = vmatpush1.msra.mxu0 0.0
    %1450 = vmatprep.subr.mxu0 0.0
    %1451 = vmatpush1.msra.mxu0 0.0
    %1452 = vmatprep.subr.mxu0 0.0
    %1453 = vmatpush1.msra.mxu0 0.0
    %1454 = vmatprep.subr.mxu0 0.0
    %1455 = vmatpush1.msra.mxu0 0.0
    %1456 = vmatprep.subr.mxu0 0.0
    %1457 = vmatpush1.msra.mxu0 0.0
    %1458 = vmatprep.subr.mxu0 0.0
    %1459 = vmatpush1.msra.mxu0 0.0
    %1460 = vmatprep.subr.mxu0 0.0
    %1461 = vmatpush1.msra.mxu0 0.0
    %1462 = vmatprep.subr.mxu0 0.0
    %1463 = vmatpush1.msra.mxu0 0.0
    %1464 = vmatprep.subr.mxu0 0.0
    %1465 = vmatpush1.msra.mxu0 0.0
    %1466 = vmatprep.subr.mxu0 0.0
    %1467 = vmatpush1.msra.mxu0 0.0
    %1468 = vmatprep.subr.mxu0 0.0
    %1469 = vmatpush1.msra.mxu0 0.0
    %1470 = vmatprep.subr.mxu0 0.0
    %1471 = vmatpush1.msra.mxu0 %v1368
    %1472 = vmatprep.subr.mxu0 0.0
    %1473 = vmatpush1.msra.mxu0 %v1367
    %1474 = vmatprep.subr.mxu0 0.0
    %1475 = vmatpush1.msra.mxu0 %v1366
    %1476 = vmatprep.subr.mxu0 0.0
    %1477 = vmatpush1.msra.mxu0 %v1365
    %1478 = vmatprep.subr.mxu0 0.0
    %1479 = vmatpush2.msra.mxu0 0.0
    %1480 = vmatprep.subr.mxu0 0.0
    %1481 = vmatpush2.msra.mxu0 0.0
    %1482 = vmatprep.subr.mxu0 0.0
    %1483 = vmatpush2.msra.mxu0 0.0
    %1484 = vmatprep.subr.mxu0 0.0
    %1485 = vmatpush2.msra.mxu0 0.0
    %1486 = vmatprep.subr.mxu0 0.0
    %1487 = vmatpush2.msra.mxu0 0.0
    %1488 = vmatprep.subr.mxu0 0.0
    %1489 = vmatpush2.msra.mxu0 0.0
    %1490 = vmatprep.subr.mxu0 0.0
    %1491 = vmatpush2.msra.mxu0 0.0
    %1492 = vmatprep.subr.mxu0 0.0
    %1493 = vmatpush2.msra.mxu0 0.0
    %1494 = vmatprep.subr.mxu0 0.0
    %1495 = vmatpush2.msra.mxu0 0.0
    %1496 = vmatprep.subr.mxu0 0.0
    %1497 = vmatpush2.msra.mxu0 0.0
    %1498 = vmatprep.subr.mxu0 0.0
    %1499 = vmatpush2.msra.mxu0 0.0
    %1500 = vmatprep.subr.mxu0 0.0
    %1501 = vmatpush2.msra.mxu0 0.0
    %1502 = vmatprep.subr.mxu0 0.0
    %1503 = vmatpush2.msra.mxu0 0.0
    %1504 = vmatprep.subr.mxu0 0.0
    %1505 = vmatpush2.msra.mxu0 0.0
    %1506 = vmatprep.subr.mxu0 0.0
    %1507 = vmatpush2.msra.mxu0 0.0
    %1508 = vmatprep.subr.mxu0 0.0
    %1509 = vmatpush2.msra.mxu0 0.0
    %1510 = vmatprep.mubr.f32.mxu0 0.0
    %1511 = vmatmul.mubr.f32.gmra.mxu0 %v925
    %v1512 = vpop.f32.mrf.mxu0
    %v1513 = vadd.f32 %v1443, %v1512
    %v1514 = vpop.f32.mrf.mxu0
    %1515 = vdwg.mxu0
    %v1516 = vld [vmem:[%s5 + $0xc0] sm:$0x1]
    %v1517 = vlaneseq
    %v1518 = vshrl.u32 %v1517, 7
    %v1519 = vsub.s32 0, %v1518
    %v1520 = vrot.slane %v1516, %v1519
    %v1521 = vadd.f32 %v1513, %v1520
    %v1522 = vmax.f32 %v1521, 0.0
    %v1523 = vld [vmem:[%s5 + $0x40] sm:$0xff]
    %v1524 = vld [vmem:[%s5 + $0x48] sm:$0xff]
    %v1525 = vld [vmem:[%s5 + $0x50] sm:$0xff]
    %v1526 = vld [vmem:[%s5 + $0x58] sm:$0xff]
    %v1527 = vld [vmem:[%s5 + $0x60] sm:$0xff]
    %v1528 = vld [vmem:[%s5 + $0x68] sm:$0xff]
    %v1529 = vld [vmem:[%s5 + $0x70] sm:$0xff]
    %v1530 = vld [vmem:[%s5 + $0x78] sm:$0xff]
    %v1531 = vld [vmem:[%s5 + $0x80] sm:$0xff]
    %v1532 = vld [vmem:[%s5 + $0x88] sm:$0xff]
    %v1533 = vld [vmem:[%s5 + $0x90] sm:$0xff]
    %v1534 = vld [vmem:[%s5 + $0x98] sm:$0xff]
    %v1535 = vld [vmem:[%s5 + $0xa0] sm:$0xff]
    %v1536 = vld [vmem:[%s5 + $0xa8] sm:$0xff]
    %v1537 = vld [vmem:[%s5 + $0xb0] sm:$0xff]
    %v1538 = vld [vmem:[%s5 + $0xb8] sm:$0xff]
    %v1539 = vld [vmem:[%s5 + $0xc1] sm:$0x1]
    %v1540 = vlaneseq
    %v1541 = vshrl.u32 %v1540, 7
    %v1542 = vsub.s32 0, %v1541
    %v1543 = vrot.slane %v1539, %v1542
    %1544 = vmatprep.subr.mxu0 0.0
    %1545 = vmatpush1.msra.mxu0 %v1538
    %1546 = vmatprep.subr.mxu0 0.0
    %1547 = vmatpush1.msra.mxu0 %v1537
    %1548 = vmatprep.subr.mxu0 0.0
    %1549 = vmatpush1.msra.mxu0 %v1536
    %1550 = vmatprep.subr.mxu0 0.0
    %1551 = vmatpush1.msra.mxu0 %v1535
    %1552 = vmatprep.subr.mxu0 0.0
    %1553 = vmatpush1.msra.mxu0 %v1534
    %1554 = vmatprep.subr.mxu0 0.0
    %1555 = vmatpush1.msra.mxu0 %v1533
    %1556 = vmatprep.subr.mxu0 0.0
    %1557 = vmatpush1.msra.mxu0 %v1532
    %1558 = vmatprep.subr.mxu0 0.0
    %1559 = vmatpush1.msra.mxu0 %v1531
    %1560 = vmatprep.subr.mxu0 0.0
    %1561 = vmatpush1.msra.mxu0 %v1530
    %1562 = vmatprep.subr.mxu0 0.0
    %1563 = vmatpush1.msra.mxu0 %v1529
    %1564 = vmatprep.subr.mxu0 0.0
    %1565 = vmatpush1.msra.mxu0 %v1528
    %1566 = vmatprep.subr.mxu0 0.0
    %1567 = vmatpush1.msra.mxu0 %v1527
    %1568 = vmatprep.subr.mxu0 0.0
    %1569 = vmatpush1.msra.mxu0 %v1526
    %1570 = vmatprep.subr.mxu0 0.0
    %1571 = vmatpush1.msra.mxu0 %v1525
    %1572 = vmatprep.subr.mxu0 0.0
    %1573 = vmatpush1.msra.mxu0 %v1524
    %1574 = vmatprep.subr.mxu0 0.0
    %1575 = vmatpush1.msra.mxu0 %v1523
    %1576 = vmatprep.subr.mxu0 0.0
    %1577 = vmatpush2.msra.mxu0 0.0
    %1578 = vmatprep.subr.mxu0 0.0
    %1579 = vmatpush2.msra.mxu0 0.0
    %1580 = vmatprep.subr.mxu0 0.0
    %1581 = vmatpush2.msra.mxu0 0.0
    %1582 = vmatprep.subr.mxu0 0.0
    %1583 = vmatpush2.msra.mxu0 0.0
    %1584 = vmatprep.subr.mxu0 0.0
    %1585 = vmatpush2.msra.mxu0 0.0
    %1586 = vmatprep.subr.mxu0 0.0
    %1587 = vmatpush2.msra.mxu0 0.0
    %1588 = vmatprep.subr.mxu0 0.0
    %1589 = vmatpush2.msra.mxu0 0.0
    %1590 = vmatprep.subr.mxu0 0.0
    %1591 = vmatpush2.msra.mxu0 0.0
    %1592 = vmatprep.subr.mxu0 0.0
    %1593 = vmatpush2.msra.mxu0 0.0
    %1594 = vmatprep.subr.mxu0 0.0
    %1595 = vmatpush2.msra.mxu0 0.0
    %1596 = vmatprep.subr.mxu0 0.0
    %1597 = vmatpush2.msra.mxu0 0.0
    %1598 = vmatprep.subr.mxu0 0.0
    %1599 = vmatpush2.msra.mxu0 0.0
    %1600 = vmatprep.subr.mxu0 0.0
    %1601 = vmatpush2.msra.mxu0 0.0
    %1602 = vmatprep.subr.mxu0 0.0
    %1603 = vmatpush2.msra.mxu0 0.0
    %1604 = vmatprep.subr.mxu0 0.0
    %1605 = vmatpush2.msra.mxu0 0.0
    %1606 = vmatprep.subr.mxu0 0.0
    %1607 = vmatpush2.msra.mxu0 0.0
    %1608 = vmatprep.mubr.f32.mxu0 0.0
    %1609 = vmatmul.mubr.f32.gmra.mxu0 %v1522
    %v1610 = vpop.f32.mrf.mxu0
    %v1611 = vadd.f32 %v1543, %v1610
    %v1612 = vpop.f32.mrf.mxu0
    %1613 = vdwg.mxu0
    %v1614 = vld [vmem:[%s6] sm:$0xff]
    %v1615 = vld [vmem:[%s6 + $0x8] sm:$0xff]
    %v1616 = vld [vmem:[%s6 + $0x10] sm:$0xff]
    %v1617 = vld [vmem:[%s6 + $0x18] sm:$0xff]
    %v1618 = vld [vmem:[%s6 + $0x80] sm:$0x1]
    %v1619 = vlaneseq
    %v1620 = vshrl.u32 %v1619, 7
    %v1621 = vsub.s32 0, %v1620
    %v1622 = vrot.slane %v1618, %v1621
    %v1624 = vsel %vm923, %v1611, 0
    %1626 = vmatprep.subr.mxu0 0.0
    %1627 = vmatpush1.msra.mxu0 0.0
    %1628 = vmatprep.subr.mxu0 0.0
    %1629 = vmatpush1.msra.mxu0 0.0
    %1630 = vmatprep.subr.mxu0 0.0
    %1631 = vmatpush1.msra.mxu0 0.0
    %1632 = vmatprep.subr.mxu0 0.0
    %1633 = vmatpush1.msra.mxu0 0.0
    %1634 = vmatprep.subr.mxu0 0.0
    %1635 = vmatpush1.msra.mxu0 0.0
    %1636 = vmatprep.subr.mxu0 0.0
    %1637 = vmatpush1.msra.mxu0 0.0
    %1638 = vmatprep.subr.mxu0 0.0
    %1639 = vmatpush1.msra.mxu0 0.0
    %1640 = vmatprep.subr.mxu0 0.0
    %1641 = vmatpush1.msra.mxu0 0.0
    %1642 = vmatprep.subr.mxu0 0.0
    %1643 = vmatpush1.msra.mxu0 0.0
    %1644 = vmatprep.subr.mxu0 0.0
    %1645 = vmatpush1.msra.mxu0 0.0
    %1646 = vmatprep.subr.mxu0 0.0
    %1647 = vmatpush1.msra.mxu0 0.0
    %1648 = vmatprep.subr.mxu0 0.0
    %1649 = vmatpush1.msra.mxu0 0.0
    %1650 = vmatprep.subr.mxu0 0.0
    %1651 = vmatpush1.msra.mxu0 %v1617
    %1652 = vmatprep.subr.mxu0 0.0
    %1653 = vmatpush1.msra.mxu0 %v1616
    %1654 = vmatprep.subr.mxu0 0.0
    %1655 = vmatpush1.msra.mxu0 %v1615
    %1656 = vmatprep.subr.mxu0 0.0
    %1657 = vmatpush1.msra.mxu0 %v1614
    %1658 = vmatprep.subr.mxu0 0.0
    %1659 = vmatpush2.msra.mxu0 0.0
    %1660 = vmatprep.subr.mxu0 0.0
    %1661 = vmatpush2.msra.mxu0 0.0
    %1662 = vmatprep.subr.mxu0 0.0
    %1663 = vmatpush2.msra.mxu0 0.0
    %1664 = vmatprep.subr.mxu0 0.0
    %1665 = vmatpush2.msra.mxu0 0.0
    %1666 = vmatprep.subr.mxu0 0.0
    %1667 = vmatpush2.msra.mxu0 0.0
    %1668 = vmatprep.subr.mxu0 0.0
    %1669 = vmatpush2.msra.mxu0 0.0
    %1670 = vmatprep.subr.mxu0 0.0
    %1671 = vmatpush2.msra.mxu0 0.0
    %1672 = vmatprep.subr.mxu0 0.0
    %1673 = vmatpush2.msra.mxu0 0.0
    %1674 = vmatprep.subr.mxu0 0.0
    %1675 = vmatpush2.msra.mxu0 0.0
    %1676 = vmatprep.subr.mxu0 0.0
    %1677 = vmatpush2.msra.mxu0 0.0
    %1678 = vmatprep.subr.mxu0 0.0
    %1679 = vmatpush2.msra.mxu0 0.0
    %1680 = vmatprep.subr.mxu0 0.0
    %1681 = vmatpush2.msra.mxu0 0.0
    %1682 = vmatprep.subr.mxu0 0.0
    %1683 = vmatpush2.msra.mxu0 0.0
    %1684 = vmatprep.subr.mxu0 0.0
    %1685 = vmatpush2.msra.mxu0 0.0
    %1686 = vmatprep.subr.mxu0 0.0
    %1687 = vmatpush2.msra.mxu0 0.0
    %1688 = vmatprep.subr.mxu0 0.0
    %1689 = vmatpush2.msra.mxu0 0.0
    %1690 = vmatprep.mubr.f32.mxu0 0.0
    %1691 = vmatmul.mubr.f32.gmra.mxu0 %v1624
    %v1692 = vpop.f32.mrf.mxu0
    %v1693 = vadd.f32 %v1622, %v1692
    %v1694 = vpop.f32.mrf.mxu0
    %1695 = vdwg.mxu0
    %v1696 = vld [vmem:[%s6 + $0x20] sm:$0xff]
    %v1697 = vld [vmem:[%s6 + $0x28] sm:$0xff]
    %v1698 = vld [vmem:[%s6 + $0x30] sm:$0xff]
    %v1699 = vld [vmem:[%s6 + $0x38] sm:$0xff]
    %v1700 = vld [vmem:[%s6 + $0x40] sm:$0xff]
    %v1701 = vld [vmem:[%s6 + $0x48] sm:$0xff]
    %v1702 = vld [vmem:[%s6 + $0x50] sm:$0xff]
    %v1703 = vld [vmem:[%s6 + $0x58] sm:$0xff]
    %v1704 = vld [vmem:[%s6 + $0x81] sm:$0x1]
    %v1705 = vlaneseq
    %v1706 = vshrl.u32 %v1705, 7
    %v1707 = vsub.s32 0, %v1706
    %v1708 = vrot.slane %v1704, %v1707
    %1710 = vrot.lane.b32.xlu0 %v1693, 96
    %v1711 = vpop.permute.xlu0 %1710
    %v1712 = vsel %vm1013, %v1711, 0
    %1714 = vmatprep.subr.mxu0 0.0
    %1715 = vmatpush1.msra.mxu0 0.0
    %1716 = vmatprep.subr.mxu0 0.0
    %1717 = vmatpush1.msra.mxu0 0.0
    %1718 = vmatprep.subr.mxu0 0.0
    %1719 = vmatpush1.msra.mxu0 0.0
    %1720 = vmatprep.subr.mxu0 0.0
    %1721 = vmatpush1.msra.mxu0 0.0
    %1722 = vmatprep.subr.mxu0 0.0
    %1723 = vmatpush1.msra.mxu0 0.0
    %1724 = vmatprep.subr.mxu0 0.0
    %1725 = vmatpush1.msra.mxu0 0.0
    %1726 = vmatprep.subr.mxu0 0.0
    %1727 = vmatpush1.msra.mxu0 0.0
    %1728 = vmatprep.subr.mxu0 0.0
    %1729 = vmatpush1.msra.mxu0 0.0
    %1730 = vmatprep.subr.mxu0 0.0
    %1731 = vmatpush1.msra.mxu0 %v1703
    %1732 = vmatprep.subr.mxu0 0.0
    %1733 = vmatpush1.msra.mxu0 %v1702
    %1734 = vmatprep.subr.mxu0 0.0
    %1735 = vmatpush1.msra.mxu0 %v1701
    %1736 = vmatprep.subr.mxu0 0.0
    %1737 = vmatpush1.msra.mxu0 %v1700
    %1738 = vmatprep.subr.mxu0 0.0
    %1739 = vmatpush1.msra.mxu0 %v1699
    %1740 = vmatprep.subr.mxu0 0.0
    %1741 = vmatpush1.msra.mxu0 %v1698
    %1742 = vmatprep.subr.mxu0 0.0
    %1743 = vmatpush1.msra.mxu0 %v1697
    %1744 = vmatprep.subr.mxu0 0.0
    %1745 = vmatpush1.msra.mxu0 %v1696
    %1746 = vmatprep.subr.mxu0 0.0
    %1747 = vmatpush2.msra.mxu0 0.0
    %1748 = vmatprep.subr.mxu0 0.0
    %1749 = vmatpush2.msra.mxu0 0.0
    %1750 = vmatprep.subr.mxu0 0.0
    %1751 = vmatpush2.msra.mxu0 0.0
    %1752 = vmatprep.subr.mxu0 0.0
    %1753 = vmatpush2.msra.mxu0 0.0
    %1754 = vmatprep.subr.mxu0 0.0
    %1755 = vmatpush2.msra.mxu0 0.0
    %1756 = vmatprep.subr.mxu0 0.0
    %1757 = vmatpush2.msra.mxu0 0.0
    %1758 = vmatprep.subr.mxu0 0.0
    %1759 = vmatpush2.msra.mxu0 0.0
    %1760 = vmatprep.subr.mxu0 0.0
    %1761 = vmatpush2.msra.mxu0 0.0
    %1762 = vmatprep.subr.mxu0 0.0
    %1763 = vmatpush2.msra.mxu0 0.0
    %1764 = vmatprep.subr.mxu0 0.0
    %1765 = vmatpush2.msra.mxu0 0.0
    %1766 = vmatprep.subr.mxu0 0.0
    %1767 = vmatpush2.msra.mxu0 0.0
    %1768 = vmatprep.subr.mxu0 0.0
    %1769 = vmatpush2.msra.mxu0 0.0
    %1770 = vmatprep.subr.mxu0 0.0
    %1771 = vmatpush2.msra.mxu0 0.0
    %1772 = vmatprep.subr.mxu0 0.0
    %1773 = vmatpush2.msra.mxu0 0.0
    %1774 = vmatprep.subr.mxu0 0.0
    %1775 = vmatpush2.msra.mxu0 0.0
    %1776 = vmatprep.subr.mxu0 0.0
    %1777 = vmatpush2.msra.mxu0 0.0
    %1778 = vmatprep.mubr.f32.mxu0 0.0
    %1779 = vmatmul.mubr.f32.gmra.mxu0 %v1712
    %v1780 = vpop.f32.mrf.mxu0
    %v1781 = vadd.f32 %v1708, %v1780
    %v1782 = vpop.f32.mrf.mxu0
    %1783 = vdwg.mxu0
    %1785 = vrot.lane.b32.xlu0 %v1781, 96
    %v1786 = vpop.permute.xlu0 %1785
    %v1788 = vmul.f32 %v1781, %v1786
    %v1789 = vld [vmem:[%s6 + $0x60] sm:$0xff]
    %v1790 = vld [vmem:[%s6 + $0x68] sm:$0xff]
    %v1791 = vld [vmem:[%s6 + $0x70] sm:$0xff]
    %v1792 = vld [vmem:[%s6 + $0x78] sm:$0xff]
    %v1793 = vld [vmem:[%s6 + $0x82] sm:$0x1]
    %v1794 = vlaneseq
    %v1795 = vshrl.u32 %v1794, 7
    %v1796 = vsub.s32 0, %v1795
    %v1797 = vrot.slane %v1793, %v1796
    %v1799 = vsel %vm923, %v1788, 0
    %1801 = vmatprep.subr.mxu0 0.0
    %1802 = vmatpush1.msra.mxu0 0.0
    %1803 = vmatprep.subr.mxu0 0.0
    %1804 = vmatpush1.msra.mxu0 0.0
    %1805 = vmatprep.subr.mxu0 0.0
    %1806 = vmatpush1.msra.mxu0 0.0
    %1807 = vmatprep.subr.mxu0 0.0
    %1808 = vmatpush1.msra.mxu0 0.0
    %1809 = vmatprep.subr.mxu0 0.0
    %1810 = vmatpush1.msra.mxu0 0.0
    %1811 = vmatprep.subr.mxu0 0.0
    %1812 = vmatpush1.msra.mxu0 0.0
    %1813 = vmatprep.subr.mxu0 0.0
    %1814 = vmatpush1.msra.mxu0 0.0
    %1815 = vmatprep.subr.mxu0 0.0
    %1816 = vmatpush1.msra.mxu0 0.0
    %1817 = vmatprep.subr.mxu0 0.0
    %1818 = vmatpush1.msra.mxu0 0.0
    %1819 = vmatprep.subr.mxu0 0.0
    %1820 = vmatpush1.msra.mxu0 0.0
    %1821 = vmatprep.subr.mxu0 0.0
    %1822 = vmatpush1.msra.mxu0 0.0
    %1823 = vmatprep.subr.mxu0 0.0
    %1824 = vmatpush1.msra.mxu0 0.0
    %1825 = vmatprep.subr.mxu0 0.0
    %1826 = vmatpush1.msra.mxu0 %v1792
    %1827 = vmatprep.subr.mxu0 0.0
    %1828 = vmatpush1.msra.mxu0 %v1791
    %1829 = vmatprep.subr.mxu0 0.0
    %1830 = vmatpush1.msra.mxu0 %v1790
    %1831 = vmatprep.subr.mxu0 0.0
    %1832 = vmatpush1.msra.mxu0 %v1789
    %1833 = vmatprep.subr.mxu0 0.0
    %1834 = vmatpush2.msra.mxu0 0.0
    %1835 = vmatprep.subr.mxu0 0.0
    %1836 = vmatpush2.msra.mxu0 0.0
    %1837 = vmatprep.subr.mxu0 0.0
    %1838 = vmatpush2.msra.mxu0 0.0
    %1839 = vmatprep.subr.mxu0 0.0
    %1840 = vmatpush2.msra.mxu0 0.0
    %1841 = vmatprep.subr.mxu0 0.0
    %1842 = vmatpush2.msra.mxu0 0.0
    %1843 = vmatprep.subr.mxu0 0.0
    %1844 = vmatpush2.msra.mxu0 0.0
    %1845 = vmatprep.subr.mxu0 0.0
    %1846 = vmatpush2.msra.mxu0 0.0
    %1847 = vmatprep.subr.mxu0 0.0
    %1848 = vmatpush2.msra.mxu0 0.0
    %1849 = vmatprep.subr.mxu0 0.0
    %1850 = vmatpush2.msra.mxu0 0.0
    %1851 = vmatprep.subr.mxu0 0.0
    %1852 = vmatpush2.msra.mxu0 0.0
    %1853 = vmatprep.subr.mxu0 0.0
    %1854 = vmatpush2.msra.mxu0 0.0
    %1855 = vmatprep.subr.mxu0 0.0
    %1856 = vmatpush2.msra.mxu0 0.0
    %1857 = vmatprep.subr.mxu0 0.0
    %1858 = vmatpush2.msra.mxu0 0.0
    %1859 = vmatprep.subr.mxu0 0.0
    %1860 = vmatpush2.msra.mxu0 0.0
    %1861 = vmatprep.subr.mxu0 0.0
    %1862 = vmatpush2.msra.mxu0 0.0
    %1863 = vmatprep.subr.mxu0 0.0
    %1864 = vmatpush2.msra.mxu0 0.0
    %1865 = vmatprep.mubr.f32.mxu0 0.0
    %1866 = vmatmul.mubr.f32.gmra.mxu0 %v1799
    %v1867 = vpop.f32.mrf.mxu0
    %v1868 = vadd.f32 %v1797, %v1867
    %v1869 = vpop.f32.mrf.mxu0
    %1870 = vdwg.mxu0
    %v1871 = vsub.f32 0.0, %v1868
    %v1872 = vmul.f32 %v1871, 1.442695
    %v1873 = vpow.pop %v1872
    %v1874 = vadd.f32 %v1873, 1.0
    %v1875 = vrcp.pop %v1874
    %1877 = vrot.lane.b32.xlu0 %v1875, 32
    %v1878 = vpop.permute.xlu0 %1877
    %v1880 = vmul.f32 %v1693, %v1878
    %1881 = vrot.lane.b32.xlu0 %v1875, 64
    %v1882 = vpop.permute.xlu0 %1881
    %v1884 = vmul.f32 %v1693, %v1882
    %1886 = vrot.lane.b32.xlu0 %v1880, 96
    %v1887 = vpop.permute.xlu0 %1886
    %1889 = vrot.lane.b32.xlu0 %v1884, 64
    %v1890 = vpop.permute.xlu0 %1889
    %v1891 = vsel %vm923, %v1887, 0
    %v1893 = vsel %vm923, %v1890, 0
    %1895 = vmatprep.subr.mxu0 0.0
    %1896 = vmatpush1.xpose.msra.mxu0 0.0
    %1897 = vmatprep.subr.mxu0 0.0
    %1898 = vmatpush1.xpose.msra.mxu0 0.0
    %1899 = vmatprep.subr.mxu0 0.0
    %1900 = vmatpush1.xpose.msra.mxu0 0.0
    %1901 = vmatprep.subr.mxu0 0.0
    %1902 = vmatpush1.xpose.msra.mxu0 0.0
    %1903 = vmatprep.subr.mxu0 0.0
    %1904 = vmatpush1.xpose.msra.mxu0 0.0
    %1905 = vmatprep.subr.mxu0 0.0
    %1906 = vmatpush1.xpose.msra.mxu0 0.0
    %1907 = vmatprep.subr.mxu0 0.0
    %1908 = vmatpush1.xpose.msra.mxu0 0.0
    %1909 = vmatprep.subr.mxu0 0.0
    %1910 = vmatpush1.xpose.msra.mxu0 0.0
    %1911 = vmatprep.subr.mxu0 0.0
    %1912 = vmatpush1.xpose.msra.mxu0 0.0
    %1913 = vmatprep.subr.mxu0 0.0
    %1914 = vmatpush1.xpose.msra.mxu0 0.0
    %1915 = vmatprep.subr.mxu0 0.0
    %1916 = vmatpush1.xpose.msra.mxu0 0.0
    %1917 = vmatprep.subr.mxu0 0.0
    %1918 = vmatpush1.xpose.msra.mxu0 0.0
    %1919 = vmatprep.subr.mxu0 0.0
    %1920 = vmatpush1.xpose.msra.mxu0 0.0
    %1921 = vmatprep.subr.mxu0 0.0
    %1922 = vmatpush1.xpose.msra.mxu0 0.0
    %1923 = vmatprep.subr.mxu0 0.0
    %1924 = vmatpush1.xpose.msra.mxu0 0.0
    %1925 = vmatprep.subr.mxu0 0.0
    %1926 = vmatpush1.xpose.msra.mxu0 %v1893
    %1927 = vmatprep.subr.mxu0 0.0
    %1928 = vmatpush2.xpose.msra.mxu0 0.0
    %1929 = vmatprep.subr.mxu0 0.0
    %1930 = vmatpush2.xpose.msra.mxu0 0.0
    %1931 = vmatprep.subr.mxu0 0.0
    %1932 = vmatpush2.xpose.msra.mxu0 0.0
    %1933 = vmatprep.subr.mxu0 0.0
    %1934 = vmatpush2.xpose.msra.mxu0 0.0
    %1935 = vmatprep.subr.mxu0 0.0
    %1936 = vmatpush2.xpose.msra.mxu0 0.0
    %1937 = vmatprep.subr.mxu0 0.0
    %1938 = vmatpush2.xpose.msra.mxu0 0.0
    %1939 = vmatprep.subr.mxu0 0.0
    %1940 = vmatpush2.xpose.msra.mxu0 0.0
    %1941 = vmatprep.subr.mxu0 0.0
    %1942 = vmatpush2.xpose.msra.mxu0 0.0
    %1943 = vmatprep.subr.mxu0 0.0
    %1944 = vmatpush2.xpose.msra.mxu0 0.0
    %1945 = vmatprep.subr.mxu0 0.0
    %1946 = vmatpush2.xpose.msra.mxu0 0.0
    %1947 = vmatprep.subr.mxu0 0.0
    %1948 = vmatpush2.xpose.msra.mxu0 0.0
    %1949 = vmatprep.subr.mxu0 0.0
    %1950 = vmatpush2.xpose.msra.mxu0 0.0
    %1951 = vmatprep.subr.mxu0 0.0
    %1952 = vmatpush2.xpose.msra.mxu0 0.0
    %1953 = vmatprep.subr.mxu0 0.0
    %1954 = vmatpush2.xpose.msra.mxu0 0.0
    %1955 = vmatprep.subr.mxu0 0.0
    %1956 = vmatpush2.xpose.msra.mxu0 0.0
    %1957 = vmatprep.subr.mxu0 0.0
    %1958 = vmatpush2.xpose.msra.mxu0 0.0
    %1959 = vmatprep.mubr.f32.mxu0 0.0
    %1960 = vmatmul.mubr.f32.gmra.mxu0 %v1891
    %v1961 = vpop.f32.mrf.mxu0
    %v1962 = vadd.f32 0.0, %v1961
    %v1963 = vpop.f32.mrf.mxu0
    %1964 = vdwg.mxu0
    %v1965 = vmul.f32 %v1962, 0.17677669
    %v1966 = vsel %vm1268, %v1965, -inf
    %1967 = vmax.xlane.f32.xlu0 %v1966
    %v1968 = vpop.xlane.xlu0 %1967
    %v1969 = vrot.slane %v1968, 4
    %v1970 = vmax.f32 %v1968, %v1969
    %v1971 = vrot.slane %v1970, 2
    %v1972 = vmax.f32 %v1970, %v1971
    %v1973 = vrot.slane %v1972, 1
    %v1974 = vmax.f32 %v1972, %v1973
    %v1975 = vsub.f32 %v1965, %v1974
    %v1976 = vmul.f32 %v1975, 1.442695
    %v1977 = vpow.pop %v1976
    %v1978 = vsel %vm1268, %v1977, 0.0
    %1979 = vadd.xlane.f32.xlu0 %v1978
    %v1980 = vpop.xlane.xlu0 %1979
    %v1981 = vrot.slane %v1980, 4
    %v1982 = vadd.f32 %v1980, %v1981
    %v1983 = vrot.slane %v1982, 2
    %v1984 = vadd.f32 %v1982, %v1983
    %v1985 = vrot.slane %v1984, 1
    %v1986 = vadd.f32 %v1984, %v1985
    %v1988 = vsel %vm1268, %v1977, 0
    %1990 = vmatprep.subr.mxu0 0.0
    %1991 = vmatpush1.msra.mxu0 0.0
    %1992 = vmatprep.subr.mxu0 0.0
    %1993 = vmatpush1.msra.mxu0 0.0
    %1994 = vmatprep.subr.mxu0 0.0
    %1995 = vmatpush1.msra.mxu0 0.0
    %1996 = vmatprep.subr.mxu0 0.0
    %1997 = vmatpush1.msra.mxu0 0.0
    %1998 = vmatprep.subr.mxu0 0.0
    %1999 = vmatpush1.msra.mxu0 0.0
    %2000 = vmatprep.subr.mxu0 0.0
    %2001 = vmatpush1.msra.mxu0 0.0
    %2002 = vmatprep.subr.mxu0 0.0
    %2003 = vmatpush1.msra.mxu0 0.0
    %2004 = vmatprep.subr.mxu0 0.0
    %2005 = vmatpush1.msra.mxu0 0.0
    %2006 = vmatprep.subr.mxu0 0.0
    %2007 = vmatpush1.msra.mxu0 0.0
    %2008 = vmatprep.subr.mxu0 0.0
    %2009 = vmatpush1.msra.mxu0 0.0
    %2010 = vmatprep.subr.mxu0 0.0
    %2011 = vmatpush1.msra.mxu0 0.0
    %2012 = vmatprep.subr.mxu0 0.0
    %2013 = vmatpush1.msra.mxu0 0.0
    %2014 = vmatprep.subr.mxu0 0.0
    %2015 = vmatpush1.msra.mxu0 0.0
    %2016 = vmatprep.subr.mxu0 0.0
    %2017 = vmatpush1.msra.mxu0 0.0
    %2018 = vmatprep.subr.mxu0 0.0
    %2019 = vmatpush1.msra.mxu0 0.0
    %2020 = vmatprep.subr.mxu0 0.0
    %2021 = vmatpush1.msra.mxu0 %v1693
    %2022 = vmatprep.subr.mxu0 0.0
    %2023 = vmatpush2.msra.mxu0 0.0
    %2024 = vmatprep.subr.mxu0 0.0
    %2025 = vmatpush2.msra.mxu0 0.0
    %2026 = vmatprep.subr.mxu0 0.0
    %2027 = vmatpush2.msra.mxu0 0.0
    %2028 = vmatprep.subr.mxu0 0.0
    %2029 = vmatpush2.msra.mxu0 0.0
    %2030 = vmatprep.subr.mxu0 0.0
    %2031 = vmatpush2.msra.mxu0 0.0
    %2032 = vmatprep.subr.mxu0 0.0
    %2033 = vmatpush2.msra.mxu0 0.0
    %2034 = vmatprep.subr.mxu0 0.0
    %2035 = vmatpush2.msra.mxu0 0.0
    %2036 = vmatprep.subr.mxu0 0.0
    %2037 = vmatpush2.msra.mxu0 0.0
    %2038 = vmatprep.subr.mxu0 0.0
    %2039 = vmatpush2.msra.mxu0 0.0
    %2040 = vmatprep.subr.mxu0 0.0
    %2041 = vmatpush2.msra.mxu0 0.0
    %2042 = vmatprep.subr.mxu0 0.0
    %2043 = vmatpush2.msra.mxu0 0.0
    %2044 = vmatprep.subr.mxu0 0.0
    %2045 = vmatpush2.msra.mxu0 0.0
    %2046 = vmatprep.subr.mxu0 0.0
    %2047 = vmatpush2.msra.mxu0 0.0
    %2048 = vmatprep.subr.mxu0 0.0
    %2049 = vmatpush2.msra.mxu0 0.0
    %2050 = vmatprep.subr.mxu0 0.0
    %2051 = vmatpush2.msra.mxu0 0.0
    %2052 = vmatprep.subr.mxu0 0.0
    %2053 = vmatpush2.msra.mxu0 0.0
    %2054 = vmatprep.mubr.f32.mxu0 0.0
    %2055 = vmatmul.mubr.f32.gmra.mxu0 %v1988
    %v2056 = vpop.f32.mrf.mxu0
    %v2057 = vadd.f32 0.0, %v2056
    %v2058 = vpop.f32.mrf.mxu0
    %2059 = vdwg.mxu0
    %v2060 = vrcp.pop %v1986
    %v2061 = vmul.f32 %v2057, %v2060
    %v2062 = vld [vmem:[%s7] sm:$0xff]
    %v2063 = vld [vmem:[%s7 + $0x8] sm:$0xff]
    %v2064 = vld [vmem:[%s7 + $0x10] sm:$0xff]
    %v2065 = vld [vmem:[%s7 + $0x18] sm:$0xff]
    %v2066 = vld [vmem:[%s7 + $0x20] sm:$0xff]
    %v2067 = vld [vmem:[%s7 + $0x28] sm:$0xff]
    %v2068 = vld [vmem:[%s7 + $0x30] sm:$0xff]
    %v2069 = vld [vmem:[%s7 + $0x38] sm:$0xff]
    %v2071 = vsel %vm923, %v2061, 0
    %2073 = vmatprep.subr.mxu0 0.0
    %2074 = vmatpush1.msra.mxu0 0.0
    %2075 = vmatprep.subr.mxu0 0.0
    %2076 = vmatpush1.msra.mxu0 0.0
    %2077 = vmatprep.subr.mxu0 0.0
    %2078 = vmatpush1.msra.mxu0 0.0
    %2079 = vmatprep.subr.mxu0 0.0
    %2080 = vmatpush1.msra.mxu0 0.0
    %2081 = vmatprep.subr.mxu0 0.0
    %2082 = vmatpush1.msra.mxu0 0.0
    %2083 = vmatprep.subr.mxu0 0.0
    %2084 = vmatpush1.msra.mxu0 0.0
    %2085 = vmatprep.subr.mxu0 0.0
    %2086 = vmatpush1.msra.mxu0 0.0
    %2087 = vmatprep.subr.mxu0 0.0
    %2088 = vmatpush1.msra.mxu0 0.0
    %2089 = vmatprep.subr.mxu0 0.0
    %2090 = vmatpush1.msra.mxu0 0.0
    %2091 = vmatprep.subr.mxu0 0.0
    %2092 = vmatpush1.msra.mxu0 0.0
    %2093 = vmatprep.subr.mxu0 0.0
    %2094 = vmatpush1.msra.mxu0 0.0
    %2095 = vmatprep.subr.mxu0 0.0
    %2096 = vmatpush1.msra.mxu0 0.0
    %2097 = vmatprep.subr.mxu0 0.0
    %2098 = vmatpush1.msra.mxu0 %v2069
    %2099 = vmatprep.subr.mxu0 0.0
    %2100 = vmatpush1.msra.mxu0 %v2068
    %2101 = vmatprep.subr.mxu0 0.0
    %2102 = vmatpush1.msra.mxu0 %v2067
    %2103 = vmatprep.subr.mxu0 0.0
    %2104 = vmatpush1.msra.mxu0 %v2066
    %2105 = vmatprep.subr.mxu0 0.0
    %2106 = vmatpush2.msra.mxu0 0.0
    %2107 = vmatprep.subr.mxu0 0.0
    %2108 = vmatpush2.msra.mxu0 0.0
    %2109 = vmatprep.subr.mxu0 0.0
    %2110 = vmatpush2.msra.mxu0 0.0
    %2111 = vmatprep.subr.mxu0 0.0
    %2112 = vmatpush2.msra.mxu0 0.0
    %2113 = vmatprep.subr.mxu0 0.0
    %2114 = vmatpush2.msra.mxu0 0.0
    %2115 = vmatprep.subr.mxu0 0.0
    %2116 = vmatpush2.msra.mxu0 0.0
    %2117 = vmatprep.subr.mxu0 0.0
    %2118 = vmatpush2.msra.mxu0 0.0
    %2119 = vmatprep.subr.mxu0 0.0
    %2120 = vmatpush2.msra.mxu0 0.0
    %2121 = vmatprep.subr.mxu0 0.0
    %2122 = vmatpush2.msra.mxu0 0.0
    %2123 = vmatprep.subr.mxu0 0.0
    %2124 = vmatpush2.msra.mxu0 0.0
    %2125 = vmatprep.subr.mxu0 0.0
    %2126 = vmatpush2.msra.mxu0 0.0
    %2127 = vmatprep.subr.mxu0 0.0
    %2128 = vmatpush2.msra.mxu0 0.0
    %2129 = vmatprep.subr.mxu0 0.0
    %2130 = vmatpush2.msra.mxu0 0.0
    %2131 = vmatprep.subr.mxu0 0.0
    %2132 = vmatpush2.msra.mxu0 0.0
    %2133 = vmatprep.subr.mxu0 0.0
    %2134 = vmatpush2.msra.mxu0 0.0
    %2135 = vmatprep.subr.mxu0 0.0
    %2136 = vmatpush2.msra.mxu0 0.0
    %2137 = vmatprep.mubr.f32.mxu0 0.0
    %2138 = vmatmul.mubr.f32.gmra.mxu0 %v2071
    %v2139 = vpop.f32.mrf.mxu0
    %v2140 = vadd.f32 0.0, %v2139
    %v2141 = vpop.f32.mrf.mxu0
    %2142 = vdwg.mxu0
    %2143 = vmatprep.subr.mxu0 0.0
    %2144 = vmatpush1.msra.mxu0 0.0
    %2145 = vmatprep.subr.mxu0 0.0
    %2146 = vmatpush1.msra.mxu0 0.0
    %2147 = vmatprep.subr.mxu0 0.0
    %2148 = vmatpush1.msra.mxu0 0.0
    %2149 = vmatprep.subr.mxu0 0.0
    %2150 = vmatpush1.msra.mxu0 0.0
    %2151 = vmatprep.subr.mxu0 0.0
    %2152 = vmatpush1.msra.mxu0 0.0
    %2153 = vmatprep.subr.mxu0 0.0
    %2154 = vmatpush1.msra.mxu0 0.0
    %2155 = vmatprep.subr.mxu0 0.0
    %2156 = vmatpush1.msra.mxu0 0.0
    %2157 = vmatprep.subr.mxu0 0.0
    %2158 = vmatpush1.msra.mxu0 0.0
    %2159 = vmatprep.subr.mxu0 0.0
    %2160 = vmatpush1.msra.mxu0 0.0
    %2161 = vmatprep.subr.mxu0 0.0
    %2162 = vmatpush1.msra.mxu0 0.0
    %2163 = vmatprep.subr.mxu0 0.0
    %2164 = vmatpush1.msra.mxu0 0.0
    %2165 = vmatprep.subr.mxu0 0.0
    %2166 = vmatpush1.msra.mxu0 0.0
    %2167 = vmatprep.subr.mxu0 0.0
    %2168 = vmatpush1.msra.mxu0 %v2065
    %2169 = vmatprep.subr.mxu0 0.0
    %2170 = vmatpush1.msra.mxu0 %v2064
    %2171 = vmatprep.subr.mxu0 0.0
    %2172 = vmatpush1.msra.mxu0 %v2063
    %2173 = vmatprep.subr.mxu0 0.0
    %2174 = vmatpush1.msra.mxu0 %v2062
    %2175 = vmatprep.subr.mxu0 0.0
    %2176 = vmatpush2.msra.mxu0 0.0
    %2177 = vmatprep.subr.mxu0 0.0
    %2178 = vmatpush2.msra.mxu0 0.0
    %2179 = vmatprep.subr.mxu0 0.0
    %2180 = vmatpush2.msra.mxu0 0.0
    %2181 = vmatprep.subr.mxu0 0.0
    %2182 = vmatpush2.msra.mxu0 0.0
    %2183 = vmatprep.subr.mxu0 0.0
    %2184 = vmatpush2.msra.mxu0 0.0
    %2185 = vmatprep.subr.mxu0 0.0
    %2186 = vmatpush2.msra.mxu0 0.0
    %2187 = vmatprep.subr.mxu0 0.0
    %2188 = vmatpush2.msra.mxu0 0.0
    %2189 = vmatprep.subr.mxu0 0.0
    %2190 = vmatpush2.msra.mxu0 0.0
    %2191 = vmatprep.subr.mxu0 0.0
    %2192 = vmatpush2.msra.mxu0 0.0
    %2193 = vmatprep.subr.mxu0 0.0
    %2194 = vmatpush2.msra.mxu0 0.0
    %2195 = vmatprep.subr.mxu0 0.0
    %2196 = vmatpush2.msra.mxu0 0.0
    %2197 = vmatprep.subr.mxu0 0.0
    %2198 = vmatpush2.msra.mxu0 0.0
    %2199 = vmatprep.subr.mxu0 0.0
    %2200 = vmatpush2.msra.mxu0 0.0
    %2201 = vmatprep.subr.mxu0 0.0
    %2202 = vmatpush2.msra.mxu0 0.0
    %2203 = vmatprep.subr.mxu0 0.0
    %2204 = vmatpush2.msra.mxu0 0.0
    %2205 = vmatprep.subr.mxu0 0.0
    %2206 = vmatpush2.msra.mxu0 0.0
    %2207 = vmatprep.mubr.f32.mxu0 0.0
    %2208 = vmatmul.mubr.f32.gmra.mxu0 %v1624
    %v2209 = vpop.f32.mrf.mxu0
    %v2210 = vadd.f32 %v2140, %v2209
    %v2211 = vpop.f32.mrf.mxu0
    %2212 = vdwg.mxu0
    %v2213 = vld [vmem:[%s7 + $0xc0] sm:$0x1]
    %v2214 = vlaneseq
    %v2215 = vshrl.u32 %v2214, 7
    %v2216 = vsub.s32 0, %v2215
    %v2217 = vrot.slane %v2213, %v2216
    %v2218 = vadd.f32 %v2210, %v2217
    %v2219 = vmax.f32 %v2218, 0.0
    %v2220 = vld [vmem:[%s7 + $0x40] sm:$0xff]
    %v2221 = vld [vmem:[%s7 + $0x48] sm:$0xff]
    %v2222 = vld [vmem:[%s7 + $0x50] sm:$0xff]
    %v2223 = vld [vmem:[%s7 + $0x58] sm:$0xff]
    %v2224 = vld [vmem:[%s7 + $0x60] sm:$0xff]
    %v2225 = vld [vmem:[%s7 + $0x68] sm:$0xff]
    %v2226 = vld [vmem:[%s7 + $0x70] sm:$0xff]
    %v2227 = vld [vmem:[%s7 + $0x78] sm:$0xff]
    %v2228 = vld [vmem:[%s7 + $0x80] sm:$0xff]
    %v2229 = vld [vmem:[%s7 + $0x88] sm:$0xff]
    %v2230 = vld [vmem:[%s7 + $0x90] sm:$0xff]
    %v2231 = vld [vmem:[%s7 + $0x98] sm:$0xff]
    %v2232 = vld [vmem:[%s7 + $0xa0] sm:$0xff]
    %v2233 = vld [vmem:[%s7 + $0xa8] sm:$0xff]
    %v2234 = vld [vmem:[%s7 + $0xb0] sm:$0xff]
    %v2235 = vld [vmem:[%s7 + $0xb8] sm:$0xff]
    %v2236 = vld [vmem:[%s7 + $0xc1] sm:$0x1]
    %v2237 = vlaneseq
    %v2238 = vshrl.u32 %v2237, 7
    %v2239 = vsub.s32 0, %v2238
    %v2240 = vrot.slane %v2236, %v2239
    %2241 = vmatprep.subr.mxu0 0.0
    %2242 = vmatpush1.msra.mxu0 %v2235
    %2243 = vmatprep.subr.mxu0 0.0
    %2244 = vmatpush1.msra.mxu0 %v2234
    %2245 = vmatprep.subr.mxu0 0.0
    %2246 = vmatpush1.msra.mxu0 %v2233
    %2247 = vmatprep.subr.mxu0 0.0
    %2248 = vmatpush1.msra.mxu0 %v2232
    %2249 = vmatprep.subr.mxu0 0.0
    %2250 = vmatpush1.msra.mxu0 %v2231
    %2251 = vmatprep.subr.mxu0 0.0
    %2252 = vmatpush1.msra.mxu0 %v2230
    %2253 = vmatprep.subr.mxu0 0.0
    %2254 = vmatpush1.msra.mxu0 %v2229
    %2255 = vmatprep.subr.mxu0 0.0
    %2256 = vmatpush1.msra.mxu0 %v2228
    %2257 = vmatprep.subr.mxu0 0.0
    %2258 = vmatpush1.msra.mxu0 %v2227
    %2259 = vmatprep.subr.mxu0 0.0
    %2260 = vmatpush1.msra.mxu0 %v2226
    %2261 = vmatprep.subr.mxu0 0.0
    %2262 = vmatpush1.msra.mxu0 %v2225
    %2263 = vmatprep.subr.mxu0 0.0
    %2264 = vmatpush1.msra.mxu0 %v2224
    %2265 = vmatprep.subr.mxu0 0.0
    %2266 = vmatpush1.msra.mxu0 %v2223
    %2267 = vmatprep.subr.mxu0 0.0
    %2268 = vmatpush1.msra.mxu0 %v2222
    %2269 = vmatprep.subr.mxu0 0.0
    %2270 = vmatpush1.msra.mxu0 %v2221
    %2271 = vmatprep.subr.mxu0 0.0
    %2272 = vmatpush1.msra.mxu0 %v2220
    %2273 = vmatprep.subr.mxu0 0.0
    %2274 = vmatpush2.msra.mxu0 0.0
    %2275 = vmatprep.subr.mxu0 0.0
    %2276 = vmatpush2.msra.mxu0 0.0
    %2277 = vmatprep.subr.mxu0 0.0
    %2278 = vmatpush2.msra.mxu0 0.0
    %2279 = vmatprep.subr.mxu0 0.0
    %2280 = vmatpush2.msra.mxu0 0.0
    %2281 = vmatprep.subr.mxu0 0.0
    %2282 = vmatpush2.msra.mxu0 0.0
    %2283 = vmatprep.subr.mxu0 0.0
    %2284 = vmatpush2.msra.mxu0 0.0
    %2285 = vmatprep.subr.mxu0 0.0
    %2286 = vmatpush2.msra.mxu0 0.0
    %2287 = vmatprep.subr.mxu0 0.0
    %2288 = vmatpush2.msra.mxu0 0.0
    %2289 = vmatprep.subr.mxu0 0.0
    %2290 = vmatpush2.msra.mxu0 0.0
    %2291 = vmatprep.subr.mxu0 0.0
    %2292 = vmatpush2.msra.mxu0 0.0
    %2293 = vmatprep.subr.mxu0 0.0
    %2294 = vmatpush2.msra.mxu0 0.0
    %2295 = vmatprep.subr.mxu0 0.0
    %2296 = vmatpush2.msra.mxu0 0.0
    %2297 = vmatprep.subr.mxu0 0.0
    %2298 = vmatpush2.msra.mxu0 0.0
    %2299 = vmatprep.subr.mxu0 0.0
    %2300 = vmatpush2.msra.mxu0 0.0
    %2301 = vmatprep.subr.mxu0 0.0
    %2302 = vmatpush2.msra.mxu0 0.0
    %2303 = vmatprep.subr.mxu0 0.0
    %2304 = vmatpush2.msra.mxu0 0.0
    %2305 = vmatprep.mubr.f32.mxu0 0.0
    %2306 = vmatmul.mubr.f32.gmra.mxu0 %v2219
    %v2307 = vpop.f32.mrf.mxu0
    %v2308 = vadd.f32 %v2240, %v2307
    %v2309 = vpop.f32.mrf.mxu0
    %2310 = vdwg.mxu0
    %v2311 = vld [vmem:[%s7 + $0xc8] sm:$0xff]
    %v2312 = vld [vmem:[%s7 + $0xd0] sm:$0xff]
    %v2313 = vld [vmem:[%s7 + $0xd8] sm:$0xff]
    %v2314 = vld [vmem:[%s7 + $0xe0] sm:$0xff]
    %v2315 = vld [vmem:[%s7 + $0xe8] sm:$0x1]
    %v2316 = vlaneseq
    %v2317 = vshrl.u32 %v2316, 7
    %v2318 = vsub.s32 0, %v2317
    %v2319 = vrot.slane %v2315, %v2318
    %v2321 = vsel %vm923, %v2308, 0
    %2323 = vmatprep.subr.mxu0 0.0
    %2324 = vmatpush1.msra.mxu0 0.0
    %2325 = vmatprep.subr.mxu0 0.0
    %2326 = vmatpush1.msra.mxu0 0.0
    %2327 = vmatprep.subr.mxu0 0.0
    %2328 = vmatpush1.msra.mxu0 0.0
    %2329 = vmatprep.subr.mxu0 0.0
    %2330 = vmatpush1.msra.mxu0 0.0
    %2331 = vmatprep.subr.mxu0 0.0
    %2332 = vmatpush1.msra.mxu0 0.0
    %2333 = vmatprep.subr.mxu0 0.0
    %2334 = vmatpush1.msra.mxu0 0.0
    %2335 = vmatprep.subr.mxu0 0.0
    %2336 = vmatpush1.msra.mxu0 0.0
    %2337 = vmatprep.subr.mxu0 0.0
    %2338 = vmatpush1.msra.mxu0 0.0
    %2339 = vmatprep.subr.mxu0 0.0
    %2340 = vmatpush1.msra.mxu0 0.0
    %2341 = vmatprep.subr.mxu0 0.0
    %2342 = vmatpush1.msra.mxu0 0.0
    %2343 = vmatprep.subr.mxu0 0.0
    %2344 = vmatpush1.msra.mxu0 0.0
    %2345 = vmatprep.subr.mxu0 0.0
    %2346 = vmatpush1.msra.mxu0 0.0
    %2347 = vmatprep.subr.mxu0 0.0
    %2348 = vmatpush1.msra.mxu0 %v2314
    %2349 = vmatprep.subr.mxu0 0.0
    %2350 = vmatpush1.msra.mxu0 %v2313
    %2351 = vmatprep.subr.mxu0 0.0
    %2352 = vmatpush1.msra.mxu0 %v2312
    %2353 = vmatprep.subr.mxu0 0.0
    %2354 = vmatpush1.msra.mxu0 %v2311
    %2355 = vmatprep.subr.mxu0 0.0
    %2356 = vmatpush2.msra.mxu0 0.0
    %2357 = vmatprep.subr.mxu0 0.0
    %2358 = vmatpush2.msra.mxu0 0.0
    %2359 = vmatprep.subr.mxu0 0.0
    %2360 = vmatpush2.msra.mxu0 0.0
    %2361 = vmatprep.subr.mxu0 0.0
    %2362 = vmatpush2.msra.mxu0 0.0
    %2363 = vmatprep.subr.mxu0 0.0
    %2364 = vmatpush2.msra.mxu0 0.0
    %2365 = vmatprep.subr.mxu0 0.0
    %2366 = vmatpush2.msra.mxu0 0.0
    %2367 = vmatprep.subr.mxu0 0.0
    %2368 = vmatpush2.msra.mxu0 0.0
    %2369 = vmatprep.subr.mxu0 0.0
    %2370 = vmatpush2.msra.mxu0 0.0
    %2371 = vmatprep.subr.mxu0 0.0
    %2372 = vmatpush2.msra.mxu0 0.0
    %2373 = vmatprep.subr.mxu0 0.0
    %2374 = vmatpush2.msra.mxu0 0.0
    %2375 = vmatprep.subr.mxu0 0.0
    %2376 = vmatpush2.msra.mxu0 0.0
    %2377 = vmatprep.subr.mxu0 0.0
    %2378 = vmatpush2.msra.mxu0 0.0
    %2379 = vmatprep.subr.mxu0 0.0
    %2380 = vmatpush2.msra.mxu0 0.0
    %2381 = vmatprep.subr.mxu0 0.0
    %2382 = vmatpush2.msra.mxu0 0.0
    %2383 = vmatprep.subr.mxu0 0.0
    %2384 = vmatpush2.msra.mxu0 0.0
    %2385 = vmatprep.subr.mxu0 0.0
    %2386 = vmatpush2.msra.mxu0 0.0
    %2387 = vmatprep.mubr.f32.mxu0 0.0
    %2388 = vmatmul.mubr.f32.gmra.mxu0 %v2321
    %v2389 = vpop.f32.mrf.mxu0
    %v2390 = vadd.f32 %v2319, %v2389
    %v2391 = vpop.f32.mrf.mxu0
    %2392 = vdwg.mxu0
    %2393 = vmax.xlane.f32.xlu0 %v2390
    %v2394 = vpop.xlane.xlu0 %2393
    %v2395 = vsub.f32 %v2390, %v2394
    %v2396 = vmul.f32 %v2395, 1.442695
    %v2397 = vpow.pop %v2396
    %2398 = vadd.xlane.f32.xlu0 %v2397
    %v2399 = vpop.xlane.xlu0 %2398
    %v2400 = vlog2.pop %v2399
    %v2401 = vmul.f32 %v2400, 0.6931472
    %v2402 = vadd.f32 %v2394, %v2401
    %v2403 = vsub.f32 %v2390, %v2402
    %2404 = vst [vmem:[#allocation2] sm:$0xff] %v2403
    // Predicated region
    $region34: #{ua_model2.1} parent=1 // pred_check
      _
    $region35: #{ua_model2.1} parent=1 // pred_check_branch
      %2406 = sbr.rel (0) target = $region37
    $region36: #{ua_model2.1} parent=1 // pred_region
      %s2408 = ssub.s32 128, 128
      %2409 = vsyncadd [#allocation3], %s2408
      %s2411 = sshll.u32 [#allocation2], 4
      %s2412 = int_to_ptr.vmem [resolvable:$true] %s2411
      %2414 = dma.vmem_to_hbm [thread:$0]  %s2412, 128, %s8, [#allocation3]
    $region37: #{ua_model2.1} parent=1 // pred_fallthru
      _
    // Predicated region
    $region38: #{ua_model2.1} parent=1 // pred_check
      _
    $region39: #{ua_model2.1} parent=1 // pred_check_branch
      %2416 = sbr.rel (0) target = $region41
    $region40: #{ua_model2.1} parent=1 // pred_region
      %2417 = dma.done [#allocation3], 128
    $region41: #{ua_model2.1} parent=1 // pred_fallthru
      _
    %2418 = vsyncpa [#allocation3], 1

</llo_original>
